<compile_context>
chip_gen: v7x
topology: tpu7x:2x2x1
jax: 0.10.0
libtpu: 0.0.40
codegen_flags: <defaults>
</compile_context>

<pallas_src>
import functools
import math

import jax
import jax.numpy as jnp
from jax.experimental import pallas as pl
from jax.experimental.pallas import tpu as pltpu

ACT_THRESHOLD = 1.0 - 0.1   # ACT_basic.threshold
LANES = 128                 # lane-dense output width


# ----------------------------------------------------------------------------
# Fused kernel: 2 x (embedding_proj -> ACT loop -> LayerNorm -> seq-sum)
#               -> softmax(sigmoid(linear(ctx_sum + tgt_sum)))
# ----------------------------------------------------------------------------
def _emotion_kernel(
    # context encoder operands
    c_x, c_wproj, c_time, c_pos, c_wp, c_wfn, c_bfn, c_gamma, c_beta, c_seg,
    # target encoder operands
    t_x, t_wproj, t_time, t_pos, t_wp, t_wfn, t_bfn, t_gamma, t_beta, t_seg,
    # classifier operands (lane-padded to LANES)
    wlin_ref, blin_ref,
    # SMEM scalars (ACT halting-linear bias per encoder)
    c_bp_ref, t_bp_ref,
    # output: (B, LANES) softmax logits; lanes >= n_cls are zero
    out_ref,
    *,
    max_hop,
    n_cls,
    ln_eps=1e-6,
):
    def encode(x_ref, wproj_ref, time_ref, pos_ref, wp_ref, wfn_ref, bfn_ref,
               gamma_ref, beta_ref, seg_ref, bp):
        # embedding projection for all B*S tokens in one MXU matmul
        state = jnp.dot(x_ref[...], wproj_ref[...],
                        preferred_element_type=jnp.float32)           # (B*S, H)
        time_sig = time_ref[...]                                      # (B*S, H)
        pos = pos_ref[...]                                            # (hop, H)
        wp_row = wp_ref[...]                                          # (1, H)
        wfn = wfn_ref[...]
        bfn = bfn_ref[...]

        n_tok = state.shape[0]
        hp = jnp.zeros((n_tok, 1), jnp.float32)        # halting_probability
        remainders = jnp.zeros((n_tok, 1), jnp.float32)
        prev_state = jnp.zeros_like(state)

        # The reference `while` loop runs at most max_hop iterations; once a
        # token halts its update weight is exactly 0, so a fixed trip-count
        # unrolled loop reproduces the dynamics exactly.
        for step in range(max_hop):
            state = state + time_sig + pos[step:step + 1, :]
            # halting prob: VPU multiply + lane reduce (no 1-column matmul)
            p = jax.nn.sigmoid(
                jnp.sum(state * wp_row, axis=-1, keepdims=True) + bp)  # (B*S,1)
            still_running = (hp < 1.0).astype(jnp.float32)
            hp_cand = hp + p * still_running          # hoisted common subexpr
            new_halted = (hp_cand > ACT_THRESHOLD).astype(jnp.float32) * still_running
            still_running = (hp_cand <= ACT_THRESHOLD).astype(jnp.float32) * still_running
            hp = hp + p * still_running
            remainders = remainders + new_halted * (1.0 - hp)
            hp = hp + new_halted * remainders
            update_weights = p * still_running + new_halted * remainders
            # TODO(synk): EncoderLayer (multi-head attention + position-wise
            # FFN) is not defined in the provided source; a deterministic
            # per-token linear+ReLU transform stands in for `fn(state)`.
            state = jax.nn.relu(
                jnp.dot(state, wfn, preferred_element_type=jnp.float32) + bfn)
            prev_state = state * update_weights + prev_state * (1.0 - update_weights)

        # TODO(synk): custom LayerNorm class not provided; standard LayerNorm.
        mu = jnp.mean(prev_state, axis=-1, keepdims=True)
        var = jnp.mean((prev_state - mu) ** 2, axis=-1, keepdims=True)
        y = (prev_state - mu) * jax.lax.rsqrt(var + ln_eps)
        y = y * gamma_ref[...] + beta_ref[...]

        # torch.sum(..., dim=-2) per batch row, as one small segment matmul.
        return jnp.dot(seg_ref[...], y, preferred_element_type=jnp.float32)  # (B,H)

    ctx_sum = encode(c_x, c_wproj, c_time, c_pos, c_wp, c_wfn, c_bfn,
                     c_gamma, c_beta, c_seg, c_bp_ref[0])
    tgt_sum = encode(t_x, t_wproj, t_time, t_pos, t_wp, t_wfn, t_bfn,
                     t_gamma, t_beta, t_seg, t_bp_ref[0])

    # classifier: logit = softmax(sigmoid(linear(ctx_sum + tgt_sum)))
    feat = ctx_sum + tgt_sum                                           # (B, H)
    pre = jnp.dot(feat, wlin_ref[...],
                  preferred_element_type=jnp.float32) + blin_ref[...]  # (B, LANES)
    pre = jax.nn.sigmoid(pre)
    lane = jax.lax.broadcasted_iota(jnp.int32, pre.shape, 1)
    pre = jnp.where(lane < n_cls, pre, -1e30)        # mask padded lanes
    m = jnp.max(pre, axis=-1, keepdims=True)
    e = jnp.exp(pre - m)
    out_ref[...] = e / jnp.sum(e, axis=-1, keepdims=True)


# ----------------------------------------------------------------------------
# Wrapper: build operands, one fused pallas_call
# ----------------------------------------------------------------------------
def emotion_logits(context, target, params, max_hop):
    B, S_c, E = context.shape
    _, S_t, _ = target.shape
    H = params["encoder"]["wproj"].shape[1]
    C = params["wlin"].shape[1]

    def enc_operands(x, p, S):
        vmem = [
            x.reshape(B * S, E),                                  # tokens
            p["wproj"],                                           # (E, H)
            jnp.tile(p["time"], (B, 1)),                          # (B*S, H)
            p["pos"],                                             # (hop, H)
            p["wp"].reshape(1, H),                                # (1, H) row
            p["wfn"], p["bfn"], p["gamma"], p["beta"],
            jnp.repeat(jnp.eye(B, dtype=jnp.float32), S, axis=1),  # (B, B*S)
        ]
        return vmem, p["bp"].reshape(1)

    c_vmem, c_bp = enc_operands(context, params["context_encoder"], S_c)
    t_vmem, t_bp = enc_operands(target, params["encoder"], S_t)
    wlin_pad = jnp.pad(params["wlin"], ((0, 0), (0, LANES - C)))
    blin_pad = jnp.pad(params["blin"], ((0, 0), (0, LANES - C)))

    vmem_ops = c_vmem + t_vmem + [wlin_pad, blin_pad]
    smem_ops = [c_bp, t_bp]

    vmem_specs = [pl.BlockSpec(a.shape, lambda i: (0, 0)) for a in vmem_ops]
    smem_specs = [pl.BlockSpec(memory_space=pltpu.MemorySpace.SMEM)] * len(smem_ops)

    logit_pad = pl.pallas_call(
        functools.partial(_emotion_kernel, max_hop=max_hop, n_cls=C),
        out_shape=jax.ShapeDtypeStruct((B, LANES), jnp.float32),
        grid=(1,),
        in_specs=vmem_specs + smem_specs,
        out_specs=pl.BlockSpec((B, LANES), lambda i: (0, 0)),
        compiler_params=pltpu.CompilerParams(dimension_semantics=("arbitrary",)),
    )(*vmem_ops, *smem_ops)
    return logit_pad[:, :C]                                          # (B, C)


# ----------------------------------------------------------------------------
# Parameter setup (deterministic, in-script)
# ----------------------------------------------------------------------------
def gen_timing_signal(length, channels, min_timescale=1.0, max_timescale=1e4):
    position = jnp.arange(length, dtype=jnp.float32)
    num_timescales = channels // 2
    log_inc = math.log(float(max_timescale) / float(min_timescale)) / max(
        num_timescales - 1, 1)
    inv_timescales = min_timescale * jnp.exp(
        jnp.arange(num_timescales, dtype=jnp.float32) * -log_inc)
    scaled_time = position[:, None] * inv_timescales[None, :]
    signal = jnp.concatenate([jnp.sin(scaled_time), jnp.cos(scaled_time)], axis=1)
    pad = channels - signal.shape[1]
    if pad > 0:
        signal = jnp.pad(signal, ((0, 0), (0, pad)))
    return signal  # (length, channels)


def init_encoder_params(key, S, E, H, max_hop):
    ks = jax.random.split(key, 4)
    scale = 0.1
    return {
        "wproj": scale * jax.random.normal(ks[0], (E, H), jnp.float32),
        "time": gen_timing_signal(S, H),
        "pos": gen_timing_signal(max_hop, H),
        "wp": scale * jax.random.normal(ks[1], (H, 1), jnp.float32),
        "bp": jnp.ones((1,), jnp.float32),   # self.p.bias.data.fill_(1)
        "wfn": scale * jax.random.normal(ks[2], (H, H), jnp.float32),
        "bfn": scale * jax.random.normal(ks[3], (1, H), jnp.float32),
        "gamma": jnp.ones((1, H), jnp.float32),
        "beta": jnp.zeros((1, H), jnp.float32),
    }


# ----------------------------------------------------------------------------
# Emotion.forward
# ----------------------------------------------------------------------------
def emotion_forward(context, target, emotion, params, max_hop, predict=False):
    emotion = (emotion > 0).astype(jnp.int32)

    logit = emotion_logits(context, target, params, max_hop)   # (B, 2)
    predic = jnp.argmax(logit, axis=1)

    loss = jnp.asarray(-1.0, jnp.float32)
    train_acc = jnp.asarray(-1.0, jnp.float32)
    if not predict:
        # Forward value of F.cross_entropy(logit, emotion) — log_softmax is
        # applied on top of the already-softmaxed logits, as in the reference.
        logp = jax.nn.log_softmax(logit, axis=-1)
        loss = -jnp.mean(jnp.take_along_axis(logp, emotion[:, None], axis=1))
        train_acc = jnp.mean((predic == emotion).astype(jnp.float32))
        # TODO(synk): optimizer.zero_grad / loss.backward / scheduler.step are
        # training-side ops with no forward-pass Pallas equivalent; omitted.
    return loss, train_acc, predic


if __name__ == "__main__":
    B, S_CTX, S_TGT, E, H, MAX_HOP, N_CLS = 2, 8, 8, 32, 32, 3, 2

    key = jax.random.PRNGKey(0)
    k_ctx, k_tgt, k_emo, k_enc, k_cenc, k_lin = jax.random.split(key, 6)

    params = {
        "encoder": init_encoder_params(k_enc, S_TGT, E, H, MAX_HOP),
        "context_encoder": init_encoder_params(k_cenc, S_CTX, E, H, MAX_HOP),
        "wlin": 0.1 * jax.random.normal(k_lin, (H, N_CLS), jnp.float32),
        "blin": jnp.zeros((1, N_CLS), jnp.float32),
    }

    context = jax.random.normal(k_ctx, (B, S_CTX, E), jnp.float32)
    target = jax.random.normal(k_tgt, (B, S_TGT, E), jnp.float32)
    emotion = jax.random.randint(k_emo, (B,), 0, 8)

    loss, train_acc, predic = emotion_forward(
        context, target, emotion, params, MAX_HOP, predict=False)
    jax.block_until_ready((loss, train_acc, predic))
    print("KERNEL_OK")
</pallas_src>

<mosaic_0001>
module attributes {stable_mosaic.version = 11 : i64} {
  func.func @_emotion_kernel(%arg0: i32, %arg1: memref<16x32xf32, #tpu.memory_space<vmem>>, %arg2: memref<32x32xf32, #tpu.memory_space<vmem>>, %arg3: memref<16x32xf32, #tpu.memory_space<vmem>>, %arg4: memref<3x32xf32, #tpu.memory_space<vmem>>, %arg5: memref<1x32xf32, #tpu.memory_space<vmem>>, %arg6: memref<32x32xf32, #tpu.memory_space<vmem>>, %arg7: memref<1x32xf32, #tpu.memory_space<vmem>>, %arg8: memref<1x32xf32, #tpu.memory_space<vmem>>, %arg9: memref<1x32xf32, #tpu.memory_space<vmem>>, %arg10: memref<2x16xf32, #tpu.memory_space<vmem>>, %arg11: memref<16x32xf32, #tpu.memory_space<vmem>>, %arg12: memref<32x32xf32, #tpu.memory_space<vmem>>, %arg13: memref<16x32xf32, #tpu.memory_space<vmem>>, %arg14: memref<3x32xf32, #tpu.memory_space<vmem>>, %arg15: memref<1x32xf32, #tpu.memory_space<vmem>>, %arg16: memref<32x32xf32, #tpu.memory_space<vmem>>, %arg17: memref<1x32xf32, #tpu.memory_space<vmem>>, %arg18: memref<1x32xf32, #tpu.memory_space<vmem>>, %arg19: memref<1x32xf32, #tpu.memory_space<vmem>>, %arg20: memref<2x16xf32, #tpu.memory_space<vmem>>, %arg21: memref<32x128xf32, #tpu.memory_space<vmem>>, %arg22: memref<1x128xf32, #tpu.memory_space<vmem>>, %arg23: memref<1xf32, #tpu.memory_space<smem>>, %arg24: memref<1xf32, #tpu.memory_space<smem>>, %arg25: memref<2x128xf32, #tpu.memory_space<vmem>>) attributes {dimension_semantics = [#tpu.dimension_semantics<arbitrary>], iteration_bounds = array<i64: 1>, scalar_prefetch = 0 : i64, scratch_operands = 0 : i64, tpu.core_type = #tpu.core_type<tc>, window_params = [{pipeline_mode = #tpu.pipeline_mode<synchronous>, transform_indices = @transform_0, window_bounds = array<i64: 16, 32>}, {pipeline_mode = #tpu.pipeline_mode<synchronous>, transform_indices = @transform_1, window_bounds = array<i64: 32, 32>}, {pipeline_mode = #tpu.pipeline_mode<synchronous>, transform_indices = @transform_2, window_bounds = array<i64: 16, 32>}, {pipeline_mode = #tpu.pipeline_mode<synchronous>, transform_indices = @transform_3, window_bounds = array<i64: 3, 32>}, {pipeline_mode = #tpu.pipeline_mode<synchronous>, transform_indices = @transform_4, window_bounds = array<i64: 1, 32>}, {pipeline_mode = #tpu.pipeline_mode<synchronous>, transform_indices = @transform_5, window_bounds = array<i64: 32, 32>}, {pipeline_mode = #tpu.pipeline_mode<synchronous>, transform_indices = @transform_6, window_bounds = array<i64: 1, 32>}, {pipeline_mode = #tpu.pipeline_mode<synchronous>, transform_indices = @transform_7, window_bounds = array<i64: 1, 32>}, {pipeline_mode = #tpu.pipeline_mode<synchronous>, transform_indices = @transform_8, window_bounds = array<i64: 1, 32>}, {pipeline_mode = #tpu.pipeline_mode<synchronous>, transform_indices = @transform_9, window_bounds = array<i64: 2, 16>}, {pipeline_mode = #tpu.pipeline_mode<synchronous>, transform_indices = @transform_10, window_bounds = array<i64: 16, 32>}, {pipeline_mode = #tpu.pipeline_mode<synchronous>, transform_indices = @transform_11, window_bounds = array<i64: 32, 32>}, {pipeline_mode = #tpu.pipeline_mode<synchronous>, transform_indices = @transform_12, window_bounds = array<i64: 16, 32>}, {pipeline_mode = #tpu.pipeline_mode<synchronous>, transform_indices = @transform_13, window_bounds = array<i64: 3, 32>}, {pipeline_mode = #tpu.pipeline_mode<synchronous>, transform_indices = @transform_14, window_bounds = array<i64: 1, 32>}, {pipeline_mode = #tpu.pipeline_mode<synchronous>, transform_indices = @transform_15, window_bounds = array<i64: 32, 32>}, {pipeline_mode = #tpu.pipeline_mode<synchronous>, transform_indices = @transform_16, window_bounds = array<i64: 1, 32>}, {pipeline_mode = #tpu.pipeline_mode<synchronous>, transform_indices = @transform_17, window_bounds = array<i64: 1, 32>}, {pipeline_mode = #tpu.pipeline_mode<synchronous>, transform_indices = @transform_18, window_bounds = array<i64: 1, 32>}, {pipeline_mode = #tpu.pipeline_mode<synchronous>, transform_indices = @transform_19, window_bounds = array<i64: 2, 16>}, {pipeline_mode = #tpu.pipeline_mode<synchronous>, transform_indices = @transform_20, window_bounds = array<i64: 32, 128>}, {pipeline_mode = #tpu.pipeline_mode<synchronous>, transform_indices = @transform_21, window_bounds = array<i64: 1, 128>}, {transform_indices = @transform_22, window_bounds = array<i64: 1>}, {transform_indices = @transform_23, window_bounds = array<i64: 1>}, {pipeline_mode = #tpu.pipeline_mode<synchronous>, transform_indices = @transform_24, window_bounds = array<i64: 2, 128>}]} {
    %c0 = arith.constant 0 : index
    %0 = memref.load %arg23[%c0] : memref<1xf32, #tpu.memory_space<smem>>
    %c0_0 = arith.constant 0 : index
    %c0_1 = arith.constant 0 : index
    %1 = vector.load %arg1[%c0_0, %c0_1] : memref<16x32xf32, #tpu.memory_space<vmem>>, vector<16x32xf32>
    %c0_2 = arith.constant 0 : index
    %c0_3 = arith.constant 0 : index
    %2 = vector.load %arg2[%c0_2, %c0_3] : memref<32x32xf32, #tpu.memory_space<vmem>>, vector<32x32xf32>
    %cst = arith.constant dense<0.000000e+00> : vector<16x32xf32>
    %3 = tpu.matmul %1, %2, %cst {dimension_numbers = #tpu.dot_dimension_numbers<[1], [0], [0], [1], [0, 0, 1, 1], [], []>} : vector<16x32xf32>, vector<32x32xf32>, vector<16x32xf32> -> vector<16x32xf32>
    %c0_4 = arith.constant 0 : index
    %c0_5 = arith.constant 0 : index
    %4 = vector.load %arg3[%c0_4, %c0_5] : memref<16x32xf32, #tpu.memory_space<vmem>>, vector<16x32xf32>
    %c0_6 = arith.constant 0 : index
    %c0_7 = arith.constant 0 : index
    %5 = vector.load %arg4[%c0_6, %c0_7] : memref<3x32xf32, #tpu.memory_space<vmem>>, vector<3x32xf32>
    %c0_8 = arith.constant 0 : index
    %c0_9 = arith.constant 0 : index
    %6 = vector.load %arg5[%c0_8, %c0_9] : memref<1x32xf32, #tpu.memory_space<vmem>>, vector<1x32xf32>
    %c0_10 = arith.constant 0 : index
    %c0_11 = arith.constant 0 : index
    %7 = vector.load %arg6[%c0_10, %c0_11] : memref<32x32xf32, #tpu.memory_space<vmem>>, vector<32x32xf32>
    %c0_12 = arith.constant 0 : index
    %c0_13 = arith.constant 0 : index
    %8 = vector.load %arg7[%c0_12, %c0_13] : memref<1x32xf32, #tpu.memory_space<vmem>>, vector<1x32xf32>
    %cst_14 = arith.constant 0.000000e+00 : f32
    %9 = vector.broadcast %cst_14 : f32 to vector<16x1xf32>
    %cst_15 = arith.constant 0.000000e+00 : f32
    %10 = vector.broadcast %cst_15 : f32 to vector<16x1xf32>
    %cst_16 = arith.constant 0.000000e+00 : f32
    %11 = vector.broadcast %cst_16 : f32 to vector<16x32xf32>
    %12 = arith.addf %3, %4 : vector<16x32xf32>
    %13 = vector.extract_strided_slice %5 {offsets = [0, 0], sizes = [1, 32], strides = [1, 1]} : vector<3x32xf32> to vector<1x32xf32>
    %14 = vector.broadcast %13 : vector<1x32xf32> to vector<16x32xf32>
    %15 = arith.addf %12, %14 : vector<16x32xf32>
    %16 = vector.broadcast %6 : vector<1x32xf32> to vector<16x32xf32>
    %17 = arith.mulf %15, %16 : vector<16x32xf32>
    %cst_17 = arith.constant dense<0.000000e+00> : vector<16xf32>
    %18 = vector.multi_reduction <add>, %17, %cst_17 [1] : vector<16x32xf32> to vector<16xf32>
    %19 = vector.shape_cast %18 : vector<16xf32> to vector<16x1xf32>
    %20 = vector.broadcast %0 : f32 to vector<16x1xf32>
    %21 = arith.addf %19, %20 : vector<16x1xf32>
    %22 = arith.negf %21 : vector<16x1xf32>
    %23 = math.exp %22 : vector<16x1xf32>
    %cst_18 = arith.constant 1.000000e+00 : f32
    %24 = vector.broadcast %cst_18 : f32 to vector<16x1xf32>
    %25 = arith.addf %24, %23 : vector<16x1xf32>
    %26 = arith.divf %24, %25 : vector<16x1xf32>
    %cst_19 = arith.constant 1.000000e+00 : f32
    %27 = vector.broadcast %cst_19 : f32 to vector<16x1xf32>
    %28 = arith.cmpf olt, %9, %27 : vector<16x1xf32>
    %29 = arith.extui %28 : vector<16x1xi1> to vector<16x1xi32>
    %30 = arith.sitofp %29 : vector<16x1xi32> to vector<16x1xf32>
    %31 = arith.mulf %26, %30 : vector<16x1xf32>
    %32 = arith.addf %9, %31 : vector<16x1xf32>
    %cst_20 = arith.constant 0.899999976 : f32
    %33 = vector.broadcast %cst_20 : f32 to vector<16x1xf32>
    %34 = arith.cmpf ogt, %32, %33 : vector<16x1xf32>
    %35 = arith.extui %34 : vector<16x1xi1> to vector<16x1xi32>
    %36 = arith.sitofp %35 : vector<16x1xi32> to vector<16x1xf32>
    %37 = arith.mulf %36, %30 : vector<16x1xf32>
    %cst_21 = arith.constant 0.899999976 : f32
    %38 = vector.broadcast %cst_21 : f32 to vector<16x1xf32>
    %39 = arith.cmpf ole, %32, %38 : vector<16x1xf32>
    %40 = arith.extui %39 : vector<16x1xi1> to vector<16x1xi32>
    %41 = arith.sitofp %40 : vector<16x1xi32> to vector<16x1xf32>
    %42 = arith.mulf %41, %30 : vector<16x1xf32>
    %43 = arith.mulf %26, %42 : vector<16x1xf32>
    %44 = arith.addf %9, %43 : vector<16x1xf32>
    %cst_22 = arith.constant 1.000000e+00 : f32
    %45 = vector.broadcast %cst_22 : f32 to vector<16x1xf32>
    %46 = arith.subf %45, %44 : vector<16x1xf32>
    %47 = arith.mulf %37, %46 : vector<16x1xf32>
    %48 = arith.addf %10, %47 : vector<16x1xf32>
    %49 = arith.mulf %37, %48 : vector<16x1xf32>
    %50 = arith.addf %44, %49 : vector<16x1xf32>
    %51 = arith.mulf %26, %42 : vector<16x1xf32>
    %52 = arith.mulf %37, %48 : vector<16x1xf32>
    %53 = arith.addf %51, %52 : vector<16x1xf32>
    %cst_23 = arith.constant dense<0.000000e+00> : vector<16x32xf32>
    %54 = tpu.matmul %15, %7, %cst_23 {dimension_numbers = #tpu.dot_dimension_numbers<[1], [0], [0], [1], [0, 0, 1, 1], [], []>} : vector<16x32xf32>, vector<32x32xf32>, vector<16x32xf32> -> vector<16x32xf32>
    %55 = vector.broadcast %8 : vector<1x32xf32> to vector<16x32xf32>
    %56 = arith.addf %54, %55 : vector<16x32xf32>
    %cst_24 = arith.constant 0.000000e+00 : f32
    %57 = vector.broadcast %cst_24 : f32 to vector<16x32xf32>
    %58 = arith.maximumf %56, %57 : vector<16x32xf32>
    %59 = vector.broadcast %53 : vector<16x1xf32> to vector<16x32xf32>
    %60 = arith.mulf %58, %59 : vector<16x32xf32>
    %cst_25 = arith.constant 1.000000e+00 : f32
    %61 = vector.broadcast %cst_25 : f32 to vector<16x1xf32>
    %62 = arith.subf %61, %53 : vector<16x1xf32>
    %63 = vector.broadcast %62 : vector<16x1xf32> to vector<16x32xf32>
    %64 = arith.mulf %11, %63 : vector<16x32xf32>
    %65 = arith.addf %60, %64 : vector<16x32xf32>
    %66 = arith.addf %58, %4 : vector<16x32xf32>
    %67 = vector.extract_strided_slice %5 {offsets = [1, 0], sizes = [1, 32], strides = [1, 1]} : vector<3x32xf32> to vector<1x32xf32>
    %68 = vector.broadcast %67 : vector<1x32xf32> to vector<16x32xf32>
    %69 = arith.addf %66, %68 : vector<16x32xf32>
    %70 = vector.broadcast %6 : vector<1x32xf32> to vector<16x32xf32>
    %71 = arith.mulf %69, %70 : vector<16x32xf32>
    %cst_26 = arith.constant dense<0.000000e+00> : vector<16xf32>
    %72 = vector.multi_reduction <add>, %71, %cst_26 [1] : vector<16x32xf32> to vector<16xf32>
    %73 = vector.shape_cast %72 : vector<16xf32> to vector<16x1xf32>
    %74 = vector.broadcast %0 : f32 to vector<16x1xf32>
    %75 = arith.addf %73, %74 : vector<16x1xf32>
    %76 = arith.negf %75 : vector<16x1xf32>
    %77 = math.exp %76 : vector<16x1xf32>
    %cst_27 = arith.constant 1.000000e+00 : f32
    %78 = vector.broadcast %cst_27 : f32 to vector<16x1xf32>
    %79 = arith.addf %78, %77 : vector<16x1xf32>
    %80 = arith.divf %78, %79 : vector<16x1xf32>
    %cst_28 = arith.constant 1.000000e+00 : f32
    %81 = vector.broadcast %cst_28 : f32 to vector<16x1xf32>
    %82 = arith.cmpf olt, %50, %81 : vector<16x1xf32>
    %83 = arith.extui %82 : vector<16x1xi1> to vector<16x1xi32>
    %84 = arith.sitofp %83 : vector<16x1xi32> to vector<16x1xf32>
    %85 = arith.mulf %80, %84 : vector<16x1xf32>
    %86 = arith.addf %50, %85 : vector<16x1xf32>
    %cst_29 = arith.constant 0.899999976 : f32
    %87 = vector.broadcast %cst_29 : f32 to vector<16x1xf32>
    %88 = arith.cmpf ogt, %86, %87 : vector<16x1xf32>
    %89 = arith.extui %88 : vector<16x1xi1> to vector<16x1xi32>
    %90 = arith.sitofp %89 : vector<16x1xi32> to vector<16x1xf32>
    %91 = arith.mulf %90, %84 : vector<16x1xf32>
    %cst_30 = arith.constant 0.899999976 : f32
    %92 = vector.broadcast %cst_30 : f32 to vector<16x1xf32>
    %93 = arith.cmpf ole, %86, %92 : vector<16x1xf32>
    %94 = arith.extui %93 : vector<16x1xi1> to vector<16x1xi32>
    %95 = arith.sitofp %94 : vector<16x1xi32> to vector<16x1xf32>
    %96 = arith.mulf %95, %84 : vector<16x1xf32>
    %97 = arith.mulf %80, %96 : vector<16x1xf32>
    %98 = arith.addf %50, %97 : vector<16x1xf32>
    %cst_31 = arith.constant 1.000000e+00 : f32
    %99 = vector.broadcast %cst_31 : f32 to vector<16x1xf32>
    %100 = arith.subf %99, %98 : vector<16x1xf32>
    %101 = arith.mulf %91, %100 : vector<16x1xf32>
    %102 = arith.addf %48, %101 : vector<16x1xf32>
    %103 = arith.mulf %91, %102 : vector<16x1xf32>
    %104 = arith.addf %98, %103 : vector<16x1xf32>
    %105 = arith.mulf %80, %96 : vector<16x1xf32>
    %106 = arith.mulf %91, %102 : vector<16x1xf32>
    %107 = arith.addf %105, %106 : vector<16x1xf32>
    %cst_32 = arith.constant dense<0.000000e+00> : vector<16x32xf32>
    %108 = tpu.matmul %69, %7, %cst_32 {dimension_numbers = #tpu.dot_dimension_numbers<[1], [0], [0], [1], [0, 0, 1, 1], [], []>} : vector<16x32xf32>, vector<32x32xf32>, vector<16x32xf32> -> vector<16x32xf32>
    %109 = vector.broadcast %8 : vector<1x32xf32> to vector<16x32xf32>
    %110 = arith.addf %108, %109 : vector<16x32xf32>
    %cst_33 = arith.constant 0.000000e+00 : f32
    %111 = vector.broadcast %cst_33 : f32 to vector<16x32xf32>
    %112 = arith.maximumf %110, %111 : vector<16x32xf32>
    %113 = vector.broadcast %107 : vector<16x1xf32> to vector<16x32xf32>
    %114 = arith.mulf %112, %113 : vector<16x32xf32>
    %cst_34 = arith.constant 1.000000e+00 : f32
    %115 = vector.broadcast %cst_34 : f32 to vector<16x1xf32>
    %116 = arith.subf %115, %107 : vector<16x1xf32>
    %117 = vector.broadcast %116 : vector<16x1xf32> to vector<16x32xf32>
    %118 = arith.mulf %65, %117 : vector<16x32xf32>
    %119 = arith.addf %114, %118 : vector<16x32xf32>
    %120 = arith.addf %112, %4 : vector<16x32xf32>
    %121 = vector.extract_strided_slice %5 {offsets = [2, 0], sizes = [1, 32], strides = [1, 1]} : vector<3x32xf32> to vector<1x32xf32>
    %122 = vector.broadcast %121 : vector<1x32xf32> to vector<16x32xf32>
    %123 = arith.addf %120, %122 : vector<16x32xf32>
    %124 = vector.broadcast %6 : vector<1x32xf32> to vector<16x32xf32>
    %125 = arith.mulf %123, %124 : vector<16x32xf32>
    %cst_35 = arith.constant dense<0.000000e+00> : vector<16xf32>
    %126 = vector.multi_reduction <add>, %125, %cst_35 [1] : vector<16x32xf32> to vector<16xf32>
    %127 = vector.shape_cast %126 : vector<16xf32> to vector<16x1xf32>
    %128 = vector.broadcast %0 : f32 to vector<16x1xf32>
    %129 = arith.addf %127, %128 : vector<16x1xf32>
    %130 = arith.negf %129 : vector<16x1xf32>
    %131 = math.exp %130 : vector<16x1xf32>
    %cst_36 = arith.constant 1.000000e+00 : f32
    %132 = vector.broadcast %cst_36 : f32 to vector<16x1xf32>
    %133 = arith.addf %132, %131 : vector<16x1xf32>
    %134 = arith.divf %132, %133 : vector<16x1xf32>
    %cst_37 = arith.constant 1.000000e+00 : f32
    %135 = vector.broadcast %cst_37 : f32 to vector<16x1xf32>
    %136 = arith.cmpf olt, %104, %135 : vector<16x1xf32>
    %137 = arith.extui %136 : vector<16x1xi1> to vector<16x1xi32>
    %138 = arith.sitofp %137 : vector<16x1xi32> to vector<16x1xf32>
    %139 = arith.mulf %134, %138 : vector<16x1xf32>
    %140 = arith.addf %104, %139 : vector<16x1xf32>
    %cst_38 = arith.constant 0.899999976 : f32
    %141 = vector.broadcast %cst_38 : f32 to vector<16x1xf32>
    %142 = arith.cmpf ogt, %140, %141 : vector<16x1xf32>
    %143 = arith.extui %142 : vector<16x1xi1> to vector<16x1xi32>
    %144 = arith.sitofp %143 : vector<16x1xi32> to vector<16x1xf32>
    %145 = arith.mulf %144, %138 : vector<16x1xf32>
    %cst_39 = arith.constant 0.899999976 : f32
    %146 = vector.broadcast %cst_39 : f32 to vector<16x1xf32>
    %147 = arith.cmpf ole, %140, %146 : vector<16x1xf32>
    %148 = arith.extui %147 : vector<16x1xi1> to vector<16x1xi32>
    %149 = arith.sitofp %148 : vector<16x1xi32> to vector<16x1xf32>
    %150 = arith.mulf %149, %138 : vector<16x1xf32>
    %151 = arith.mulf %134, %150 : vector<16x1xf32>
    %152 = arith.addf %104, %151 : vector<16x1xf32>
    %cst_40 = arith.constant 1.000000e+00 : f32
    %153 = vector.broadcast %cst_40 : f32 to vector<16x1xf32>
    %154 = arith.subf %153, %152 : vector<16x1xf32>
    %155 = arith.mulf %145, %154 : vector<16x1xf32>
    %156 = arith.addf %102, %155 : vector<16x1xf32>
    %157 = arith.mulf %134, %150 : vector<16x1xf32>
    %158 = arith.mulf %145, %156 : vector<16x1xf32>
    %159 = arith.addf %157, %158 : vector<16x1xf32>
    %cst_41 = arith.constant dense<0.000000e+00> : vector<16x32xf32>
    %160 = tpu.matmul %123, %7, %cst_41 {dimension_numbers = #tpu.dot_dimension_numbers<[1], [0], [0], [1], [0, 0, 1, 1], [], []>} : vector<16x32xf32>, vector<32x32xf32>, vector<16x32xf32> -> vector<16x32xf32>
    %161 = vector.broadcast %8 : vector<1x32xf32> to vector<16x32xf32>
    %162 = arith.addf %160, %161 : vector<16x32xf32>
    %cst_42 = arith.constant 0.000000e+00 : f32
    %163 = vector.broadcast %cst_42 : f32 to vector<16x32xf32>
    %164 = arith.maximumf %162, %163 : vector<16x32xf32>
    %165 = vector.broadcast %159 : vector<16x1xf32> to vector<16x32xf32>
    %166 = arith.mulf %164, %165 : vector<16x32xf32>
    %cst_43 = arith.constant 1.000000e+00 : f32
    %167 = vector.broadcast %cst_43 : f32 to vector<16x1xf32>
    %168 = arith.subf %167, %159 : vector<16x1xf32>
    %169 = vector.broadcast %168 : vector<16x1xf32> to vector<16x32xf32>
    %170 = arith.mulf %119, %169 : vector<16x32xf32>
    %171 = arith.addf %166, %170 : vector<16x32xf32>
    %cst_44 = arith.constant dense<0.000000e+00> : vector<16xf32>
    %172 = vector.multi_reduction <add>, %171, %cst_44 [1] : vector<16x32xf32> to vector<16xf32>
    %173 = vector.shape_cast %172 : vector<16xf32> to vector<16x1xf32>
    %cst_45 = arith.constant 3.200000e+01 : f32
    %174 = vector.broadcast %cst_45 : f32 to vector<16x1xf32>
    %175 = arith.divf %173, %174 : vector<16x1xf32>
    %176 = vector.broadcast %175 : vector<16x1xf32> to vector<16x32xf32>
    %177 = arith.subf %171, %176 : vector<16x32xf32>
    %178 = arith.mulf %177, %177 : vector<16x32xf32>
    %cst_46 = arith.constant dense<0.000000e+00> : vector<16xf32>
    %179 = vector.multi_reduction <add>, %178, %cst_46 [1] : vector<16x32xf32> to vector<16xf32>
    %180 = vector.shape_cast %179 : vector<16xf32> to vector<16x1xf32>
    %cst_47 = arith.constant 3.200000e+01 : f32
    %181 = vector.broadcast %cst_47 : f32 to vector<16x1xf32>
    %182 = arith.divf %180, %181 : vector<16x1xf32>
    %183 = vector.broadcast %175 : vector<16x1xf32> to vector<16x32xf32>
    %184 = arith.subf %171, %183 : vector<16x32xf32>
    %cst_48 = arith.constant 9.99999997E-7 : f32
    %185 = vector.broadcast %cst_48 : f32 to vector<16x1xf32>
    %186 = arith.addf %182, %185 : vector<16x1xf32>
    %187 = math.rsqrt %186 : vector<16x1xf32>
    %188 = vector.broadcast %187 : vector<16x1xf32> to vector<16x32xf32>
    %189 = arith.mulf %184, %188 : vector<16x32xf32>
    %c0_49 = arith.constant 0 : index
    %c0_50 = arith.constant 0 : index
    %190 = vector.load %arg8[%c0_49, %c0_50] : memref<1x32xf32, #tpu.memory_space<vmem>>, vector<1x32xf32>
    %191 = vector.broadcast %190 : vector<1x32xf32> to vector<16x32xf32>
    %192 = arith.mulf %189, %191 : vector<16x32xf32>
    %c0_51 = arith.constant 0 : index
    %c0_52 = arith.constant 0 : index
    %193 = vector.load %arg9[%c0_51, %c0_52] : memref<1x32xf32, #tpu.memory_space<vmem>>, vector<1x32xf32>
    %194 = vector.broadcast %193 : vector<1x32xf32> to vector<16x32xf32>
    %195 = arith.addf %192, %194 : vector<16x32xf32>
    %c0_53 = arith.constant 0 : index
    %c0_54 = arith.constant 0 : index
    %196 = vector.load %arg10[%c0_53, %c0_54] : memref<2x16xf32, #tpu.memory_space<vmem>>, vector<2x16xf32>
    %cst_55 = arith.constant dense<0.000000e+00> : vector<2x32xf32>
    %197 = tpu.matmul %196, %195, %cst_55 {dimension_numbers = #tpu.dot_dimension_numbers<[1], [0], [0], [1], [0, 0, 1, 1], [], []>} : vector<2x16xf32>, vector<16x32xf32>, vector<2x32xf32> -> vector<2x32xf32>
    %c0_56 = arith.constant 0 : index
    %198 = memref.load %arg24[%c0_56] : memref<1xf32, #tpu.memory_space<smem>>
    %c0_57 = arith.constant 0 : index
    %c0_58 = arith.constant 0 : index
    %199 = vector.load %arg11[%c0_57, %c0_58] : memref<16x32xf32, #tpu.memory_space<vmem>>, vector<16x32xf32>
    %c0_59 = arith.constant 0 : index
    %c0_60 = arith.constant 0 : index
    %200 = vector.load %arg12[%c0_59, %c0_60] : memref<32x32xf32, #tpu.memory_space<vmem>>, vector<32x32xf32>
    %cst_61 = arith.constant dense<0.000000e+00> : vector<16x32xf32>
    %201 = tpu.matmul %199, %200, %cst_61 {dimension_numbers = #tpu.dot_dimension_numbers<[1], [0], [0], [1], [0, 0, 1, 1], [], []>} : vector<16x32xf32>, vector<32x32xf32>, vector<16x32xf32> -> vector<16x32xf32>
    %c0_62 = arith.constant 0 : index
    %c0_63 = arith.constant 0 : index
    %202 = vector.load %arg13[%c0_62, %c0_63] : memref<16x32xf32, #tpu.memory_space<vmem>>, vector<16x32xf32>
    %c0_64 = arith.constant 0 : index
    %c0_65 = arith.constant 0 : index
    %203 = vector.load %arg14[%c0_64, %c0_65] : memref<3x32xf32, #tpu.memory_space<vmem>>, vector<3x32xf32>
    %c0_66 = arith.constant 0 : index
    %c0_67 = arith.constant 0 : index
    %204 = vector.load %arg15[%c0_66, %c0_67] : memref<1x32xf32, #tpu.memory_space<vmem>>, vector<1x32xf32>
    %c0_68 = arith.constant 0 : index
    %c0_69 = arith.constant 0 : index
    %205 = vector.load %arg16[%c0_68, %c0_69] : memref<32x32xf32, #tpu.memory_space<vmem>>, vector<32x32xf32>
    %c0_70 = arith.constant 0 : index
    %c0_71 = arith.constant 0 : index
    %206 = vector.load %arg17[%c0_70, %c0_71] : memref<1x32xf32, #tpu.memory_space<vmem>>, vector<1x32xf32>
    %cst_72 = arith.constant 0.000000e+00 : f32
    %207 = vector.broadcast %cst_72 : f32 to vector<16x1xf32>
    %cst_73 = arith.constant 0.000000e+00 : f32
    %208 = vector.broadcast %cst_73 : f32 to vector<16x1xf32>
    %cst_74 = arith.constant 0.000000e+00 : f32
    %209 = vector.broadcast %cst_74 : f32 to vector<16x32xf32>
    %210 = arith.addf %201, %202 : vector<16x32xf32>
    %211 = vector.extract_strided_slice %203 {offsets = [0, 0], sizes = [1, 32], strides = [1, 1]} : vector<3x32xf32> to vector<1x32xf32>
    %212 = vector.broadcast %211 : vector<1x32xf32> to vector<16x32xf32>
    %213 = arith.addf %210, %212 : vector<16x32xf32>
    %214 = vector.broadcast %204 : vector<1x32xf32> to vector<16x32xf32>
    %215 = arith.mulf %213, %214 : vector<16x32xf32>
    %cst_75 = arith.constant dense<0.000000e+00> : vector<16xf32>
    %216 = vector.multi_reduction <add>, %215, %cst_75 [1] : vector<16x32xf32> to vector<16xf32>
    %217 = vector.shape_cast %216 : vector<16xf32> to vector<16x1xf32>
    %218 = vector.broadcast %198 : f32 to vector<16x1xf32>
    %219 = arith.addf %217, %218 : vector<16x1xf32>
    %220 = arith.negf %219 : vector<16x1xf32>
    %221 = math.exp %220 : vector<16x1xf32>
    %cst_76 = arith.constant 1.000000e+00 : f32
    %222 = vector.broadcast %cst_76 : f32 to vector<16x1xf32>
    %223 = arith.addf %222, %221 : vector<16x1xf32>
    %224 = arith.divf %222, %223 : vector<16x1xf32>
    %cst_77 = arith.constant 1.000000e+00 : f32
    %225 = vector.broadcast %cst_77 : f32 to vector<16x1xf32>
    %226 = arith.cmpf olt, %207, %225 : vector<16x1xf32>
    %227 = arith.extui %226 : vector<16x1xi1> to vector<16x1xi32>
    %228 = arith.sitofp %227 : vector<16x1xi32> to vector<16x1xf32>
    %229 = arith.mulf %224, %228 : vector<16x1xf32>
    %230 = arith.addf %207, %229 : vector<16x1xf32>
    %cst_78 = arith.constant 0.899999976 : f32
    %231 = vector.broadcast %cst_78 : f32 to vector<16x1xf32>
    %232 = arith.cmpf ogt, %230, %231 : vector<16x1xf32>
    %233 = arith.extui %232 : vector<16x1xi1> to vector<16x1xi32>
    %234 = arith.sitofp %233 : vector<16x1xi32> to vector<16x1xf32>
    %235 = arith.mulf %234, %228 : vector<16x1xf32>
    %cst_79 = arith.constant 0.899999976 : f32
    %236 = vector.broadcast %cst_79 : f32 to vector<16x1xf32>
    %237 = arith.cmpf ole, %230, %236 : vector<16x1xf32>
    %238 = arith.extui %237 : vector<16x1xi1> to vector<16x1xi32>
    %239 = arith.sitofp %238 : vector<16x1xi32> to vector<16x1xf32>
    %240 = arith.mulf %239, %228 : vector<16x1xf32>
    %241 = arith.mulf %224, %240 : vector<16x1xf32>
    %242 = arith.addf %207, %241 : vector<16x1xf32>
    %cst_80 = arith.constant 1.000000e+00 : f32
    %243 = vector.broadcast %cst_80 : f32 to vector<16x1xf32>
    %244 = arith.subf %243, %242 : vector<16x1xf32>
    %245 = arith.mulf %235, %244 : vector<16x1xf32>
    %246 = arith.addf %208, %245 : vector<16x1xf32>
    %247 = arith.mulf %235, %246 : vector<16x1xf32>
    %248 = arith.addf %242, %247 : vector<16x1xf32>
    %249 = arith.mulf %224, %240 : vector<16x1xf32>
    %250 = arith.mulf %235, %246 : vector<16x1xf32>
    %251 = arith.addf %249, %250 : vector<16x1xf32>
    %cst_81 = arith.constant dense<0.000000e+00> : vector<16x32xf32>
    %252 = tpu.matmul %213, %205, %cst_81 {dimension_numbers = #tpu.dot_dimension_numbers<[1], [0], [0], [1], [0, 0, 1, 1], [], []>} : vector<16x32xf32>, vector<32x32xf32>, vector<16x32xf32> -> vector<16x32xf32>
    %253 = vector.broadcast %206 : vector<1x32xf32> to vector<16x32xf32>
    %254 = arith.addf %252, %253 : vector<16x32xf32>
    %cst_82 = arith.constant 0.000000e+00 : f32
    %255 = vector.broadcast %cst_82 : f32 to vector<16x32xf32>
    %256 = arith.maximumf %254, %255 : vector<16x32xf32>
    %257 = vector.broadcast %251 : vector<16x1xf32> to vector<16x32xf32>
    %258 = arith.mulf %256, %257 : vector<16x32xf32>
    %cst_83 = arith.constant 1.000000e+00 : f32
    %259 = vector.broadcast %cst_83 : f32 to vector<16x1xf32>
    %260 = arith.subf %259, %251 : vector<16x1xf32>
    %261 = vector.broadcast %260 : vector<16x1xf32> to vector<16x32xf32>
    %262 = arith.mulf %209, %261 : vector<16x32xf32>
    %263 = arith.addf %258, %262 : vector<16x32xf32>
    %264 = arith.addf %256, %202 : vector<16x32xf32>
    %265 = vector.extract_strided_slice %203 {offsets = [1, 0], sizes = [1, 32], strides = [1, 1]} : vector<3x32xf32> to vector<1x32xf32>
    %266 = vector.broadcast %265 : vector<1x32xf32> to vector<16x32xf32>
    %267 = arith.addf %264, %266 : vector<16x32xf32>
    %268 = vector.broadcast %204 : vector<1x32xf32> to vector<16x32xf32>
    %269 = arith.mulf %267, %268 : vector<16x32xf32>
    %cst_84 = arith.constant dense<0.000000e+00> : vector<16xf32>
    %270 = vector.multi_reduction <add>, %269, %cst_84 [1] : vector<16x32xf32> to vector<16xf32>
    %271 = vector.shape_cast %270 : vector<16xf32> to vector<16x1xf32>
    %272 = vector.broadcast %198 : f32 to vector<16x1xf32>
    %273 = arith.addf %271, %272 : vector<16x1xf32>
    %274 = arith.negf %273 : vector<16x1xf32>
    %275 = math.exp %274 : vector<16x1xf32>
    %cst_85 = arith.constant 1.000000e+00 : f32
    %276 = vector.broadcast %cst_85 : f32 to vector<16x1xf32>
    %277 = arith.addf %276, %275 : vector<16x1xf32>
    %278 = arith.divf %276, %277 : vector<16x1xf32>
    %cst_86 = arith.constant 1.000000e+00 : f32
    %279 = vector.broadcast %cst_86 : f32 to vector<16x1xf32>
    %280 = arith.cmpf olt, %248, %279 : vector<16x1xf32>
    %281 = arith.extui %280 : vector<16x1xi1> to vector<16x1xi32>
    %282 = arith.sitofp %281 : vector<16x1xi32> to vector<16x1xf32>
    %283 = arith.mulf %278, %282 : vector<16x1xf32>
    %284 = arith.addf %248, %283 : vector<16x1xf32>
    %cst_87 = arith.constant 0.899999976 : f32
    %285 = vector.broadcast %cst_87 : f32 to vector<16x1xf32>
    %286 = arith.cmpf ogt, %284, %285 : vector<16x1xf32>
    %287 = arith.extui %286 : vector<16x1xi1> to vector<16x1xi32>
    %288 = arith.sitofp %287 : vector<16x1xi32> to vector<16x1xf32>
    %289 = arith.mulf %288, %282 : vector<16x1xf32>
    %cst_88 = arith.constant 0.899999976 : f32
    %290 = vector.broadcast %cst_88 : f32 to vector<16x1xf32>
    %291 = arith.cmpf ole, %284, %290 : vector<16x1xf32>
    %292 = arith.extui %291 : vector<16x1xi1> to vector<16x1xi32>
    %293 = arith.sitofp %292 : vector<16x1xi32> to vector<16x1xf32>
    %294 = arith.mulf %293, %282 : vector<16x1xf32>
    %295 = arith.mulf %278, %294 : vector<16x1xf32>
    %296 = arith.addf %248, %295 : vector<16x1xf32>
    %cst_89 = arith.constant 1.000000e+00 : f32
    %297 = vector.broadcast %cst_89 : f32 to vector<16x1xf32>
    %298 = arith.subf %297, %296 : vector<16x1xf32>
    %299 = arith.mulf %289, %298 : vector<16x1xf32>
    %300 = arith.addf %246, %299 : vector<16x1xf32>
    %301 = arith.mulf %289, %300 : vector<16x1xf32>
    %302 = arith.addf %296, %301 : vector<16x1xf32>
    %303 = arith.mulf %278, %294 : vector<16x1xf32>
    %304 = arith.mulf %289, %300 : vector<16x1xf32>
    %305 = arith.addf %303, %304 : vector<16x1xf32>
    %cst_90 = arith.constant dense<0.000000e+00> : vector<16x32xf32>
    %306 = tpu.matmul %267, %205, %cst_90 {dimension_numbers = #tpu.dot_dimension_numbers<[1], [0], [0], [1], [0, 0, 1, 1], [], []>} : vector<16x32xf32>, vector<32x32xf32>, vector<16x32xf32> -> vector<16x32xf32>
    %307 = vector.broadcast %206 : vector<1x32xf32> to vector<16x32xf32>
    %308 = arith.addf %306, %307 : vector<16x32xf32>
    %cst_91 = arith.constant 0.000000e+00 : f32
    %309 = vector.broadcast %cst_91 : f32 to vector<16x32xf32>
    %310 = arith.maximumf %308, %309 : vector<16x32xf32>
    %311 = vector.broadcast %305 : vector<16x1xf32> to vector<16x32xf32>
    %312 = arith.mulf %310, %311 : vector<16x32xf32>
    %cst_92 = arith.constant 1.000000e+00 : f32
    %313 = vector.broadcast %cst_92 : f32 to vector<16x1xf32>
    %314 = arith.subf %313, %305 : vector<16x1xf32>
    %315 = vector.broadcast %314 : vector<16x1xf32> to vector<16x32xf32>
    %316 = arith.mulf %263, %315 : vector<16x32xf32>
    %317 = arith.addf %312, %316 : vector<16x32xf32>
    %318 = arith.addf %310, %202 : vector<16x32xf32>
    %319 = vector.extract_strided_slice %203 {offsets = [2, 0], sizes = [1, 32], strides = [1, 1]} : vector<3x32xf32> to vector<1x32xf32>
    %320 = vector.broadcast %319 : vector<1x32xf32> to vector<16x32xf32>
    %321 = arith.addf %318, %320 : vector<16x32xf32>
    %322 = vector.broadcast %204 : vector<1x32xf32> to vector<16x32xf32>
    %323 = arith.mulf %321, %322 : vector<16x32xf32>
    %cst_93 = arith.constant dense<0.000000e+00> : vector<16xf32>
    %324 = vector.multi_reduction <add>, %323, %cst_93 [1] : vector<16x32xf32> to vector<16xf32>
    %325 = vector.shape_cast %324 : vector<16xf32> to vector<16x1xf32>
    %326 = vector.broadcast %198 : f32 to vector<16x1xf32>
    %327 = arith.addf %325, %326 : vector<16x1xf32>
    %328 = arith.negf %327 : vector<16x1xf32>
    %329 = math.exp %328 : vector<16x1xf32>
    %cst_94 = arith.constant 1.000000e+00 : f32
    %330 = vector.broadcast %cst_94 : f32 to vector<16x1xf32>
    %331 = arith.addf %330, %329 : vector<16x1xf32>
    %332 = arith.divf %330, %331 : vector<16x1xf32>
    %cst_95 = arith.constant 1.000000e+00 : f32
    %333 = vector.broadcast %cst_95 : f32 to vector<16x1xf32>
    %334 = arith.cmpf olt, %302, %333 : vector<16x1xf32>
    %335 = arith.extui %334 : vector<16x1xi1> to vector<16x1xi32>
    %336 = arith.sitofp %335 : vector<16x1xi32> to vector<16x1xf32>
    %337 = arith.mulf %332, %336 : vector<16x1xf32>
    %338 = arith.addf %302, %337 : vector<16x1xf32>
    %cst_96 = arith.constant 0.899999976 : f32
    %339 = vector.broadcast %cst_96 : f32 to vector<16x1xf32>
    %340 = arith.cmpf ogt, %338, %339 : vector<16x1xf32>
    %341 = arith.extui %340 : vector<16x1xi1> to vector<16x1xi32>
    %342 = arith.sitofp %341 : vector<16x1xi32> to vector<16x1xf32>
    %343 = arith.mulf %342, %336 : vector<16x1xf32>
    %cst_97 = arith.constant 0.899999976 : f32
    %344 = vector.broadcast %cst_97 : f32 to vector<16x1xf32>
    %345 = arith.cmpf ole, %338, %344 : vector<16x1xf32>
    %346 = arith.extui %345 : vector<16x1xi1> to vector<16x1xi32>
    %347 = arith.sitofp %346 : vector<16x1xi32> to vector<16x1xf32>
    %348 = arith.mulf %347, %336 : vector<16x1xf32>
    %349 = arith.mulf %332, %348 : vector<16x1xf32>
    %350 = arith.addf %302, %349 : vector<16x1xf32>
    %cst_98 = arith.constant 1.000000e+00 : f32
    %351 = vector.broadcast %cst_98 : f32 to vector<16x1xf32>
    %352 = arith.subf %351, %350 : vector<16x1xf32>
    %353 = arith.mulf %343, %352 : vector<16x1xf32>
    %354 = arith.addf %300, %353 : vector<16x1xf32>
    %355 = arith.mulf %332, %348 : vector<16x1xf32>
    %356 = arith.mulf %343, %354 : vector<16x1xf32>
    %357 = arith.addf %355, %356 : vector<16x1xf32>
    %cst_99 = arith.constant dense<0.000000e+00> : vector<16x32xf32>
    %358 = tpu.matmul %321, %205, %cst_99 {dimension_numbers = #tpu.dot_dimension_numbers<[1], [0], [0], [1], [0, 0, 1, 1], [], []>} : vector<16x32xf32>, vector<32x32xf32>, vector<16x32xf32> -> vector<16x32xf32>
    %359 = vector.broadcast %206 : vector<1x32xf32> to vector<16x32xf32>
    %360 = arith.addf %358, %359 : vector<16x32xf32>
    %cst_100 = arith.constant 0.000000e+00 : f32
    %361 = vector.broadcast %cst_100 : f32 to vector<16x32xf32>
    %362 = arith.maximumf %360, %361 : vector<16x32xf32>
    %363 = vector.broadcast %357 : vector<16x1xf32> to vector<16x32xf32>
    %364 = arith.mulf %362, %363 : vector<16x32xf32>
    %cst_101 = arith.constant 1.000000e+00 : f32
    %365 = vector.broadcast %cst_101 : f32 to vector<16x1xf32>
    %366 = arith.subf %365, %357 : vector<16x1xf32>
    %367 = vector.broadcast %366 : vector<16x1xf32> to vector<16x32xf32>
    %368 = arith.mulf %317, %367 : vector<16x32xf32>
    %369 = arith.addf %364, %368 : vector<16x32xf32>
    %cst_102 = arith.constant dense<0.000000e+00> : vector<16xf32>
    %370 = vector.multi_reduction <add>, %369, %cst_102 [1] : vector<16x32xf32> to vector<16xf32>
    %371 = vector.shape_cast %370 : vector<16xf32> to vector<16x1xf32>
    %cst_103 = arith.constant 3.200000e+01 : f32
    %372 = vector.broadcast %cst_103 : f32 to vector<16x1xf32>
    %373 = arith.divf %371, %372 : vector<16x1xf32>
    %374 = vector.broadcast %373 : vector<16x1xf32> to vector<16x32xf32>
    %375 = arith.subf %369, %374 : vector<16x32xf32>
    %376 = arith.mulf %375, %375 : vector<16x32xf32>
    %cst_104 = arith.constant dense<0.000000e+00> : vector<16xf32>
    %377 = vector.multi_reduction <add>, %376, %cst_104 [1] : vector<16x32xf32> to vector<16xf32>
    %378 = vector.shape_cast %377 : vector<16xf32> to vector<16x1xf32>
    %cst_105 = arith.constant 3.200000e+01 : f32
    %379 = vector.broadcast %cst_105 : f32 to vector<16x1xf32>
    %380 = arith.divf %378, %379 : vector<16x1xf32>
    %381 = vector.broadcast %373 : vector<16x1xf32> to vector<16x32xf32>
    %382 = arith.subf %369, %381 : vector<16x32xf32>
    %cst_106 = arith.constant 9.99999997E-7 : f32
    %383 = vector.broadcast %cst_106 : f32 to vector<16x1xf32>
    %384 = arith.addf %380, %383 : vector<16x1xf32>
    %385 = math.rsqrt %384 : vector<16x1xf32>
    %386 = vector.broadcast %385 : vector<16x1xf32> to vector<16x32xf32>
    %387 = arith.mulf %382, %386 : vector<16x32xf32>
    %c0_107 = arith.constant 0 : index
    %c0_108 = arith.constant 0 : index
    %388 = vector.load %arg18[%c0_107, %c0_108] : memref<1x32xf32, #tpu.memory_space<vmem>>, vector<1x32xf32>
    %389 = vector.broadcast %388 : vector<1x32xf32> to vector<16x32xf32>
    %390 = arith.mulf %387, %389 : vector<16x32xf32>
    %c0_109 = arith.constant 0 : index
    %c0_110 = arith.constant 0 : index
    %391 = vector.load %arg19[%c0_109, %c0_110] : memref<1x32xf32, #tpu.memory_space<vmem>>, vector<1x32xf32>
    %392 = vector.broadcast %391 : vector<1x32xf32> to vector<16x32xf32>
    %393 = arith.addf %390, %392 : vector<16x32xf32>
    %c0_111 = arith.constant 0 : index
    %c0_112 = arith.constant 0 : index
    %394 = vector.load %arg20[%c0_111, %c0_112] : memref<2x16xf32, #tpu.memory_space<vmem>>, vector<2x16xf32>
    %cst_113 = arith.constant dense<0.000000e+00> : vector<2x32xf32>
    %395 = tpu.matmul %394, %393, %cst_113 {dimension_numbers = #tpu.dot_dimension_numbers<[1], [0], [0], [1], [0, 0, 1, 1], [], []>} : vector<2x16xf32>, vector<16x32xf32>, vector<2x32xf32> -> vector<2x32xf32>
    %396 = arith.addf %197, %395 : vector<2x32xf32>
    %c0_114 = arith.constant 0 : index
    %c0_115 = arith.constant 0 : index
    %397 = vector.load %arg21[%c0_114, %c0_115] : memref<32x128xf32, #tpu.memory_space<vmem>>, vector<32x128xf32>
    %cst_116 = arith.constant dense<0.000000e+00> : vector<2x128xf32>
    %398 = tpu.matmul %396, %397, %cst_116 {dimension_numbers = #tpu.dot_dimension_numbers<[1], [0], [0], [1], [0, 0, 1, 1], [], []>} : vector<2x32xf32>, vector<32x128xf32>, vector<2x128xf32> -> vector<2x128xf32>
    %c0_117 = arith.constant 0 : index
    %c0_118 = arith.constant 0 : index
    %399 = vector.load %arg22[%c0_117, %c0_118] : memref<1x128xf32, #tpu.memory_space<vmem>>, vector<1x128xf32>
    %400 = vector.broadcast %399 : vector<1x128xf32> to vector<2x128xf32>
    %401 = arith.addf %398, %400 : vector<2x128xf32>
    %402 = arith.negf %401 : vector<2x128xf32>
    %403 = math.exp %402 : vector<2x128xf32>
    %cst_119 = arith.constant 1.000000e+00 : f32
    %404 = vector.broadcast %cst_119 : f32 to vector<2x128xf32>
    %405 = arith.addf %404, %403 : vector<2x128xf32>
    %406 = arith.divf %404, %405 : vector<2x128xf32>
    %407 = tpu.iota {dimensions = array<i32: 1>} : vector<2x128xi32>
    %c2_i32 = arith.constant 2 : i32
    %408 = vector.broadcast %c2_i32 : i32 to vector<2x128xi32>
    %409 = arith.cmpi slt, %407, %408 : vector<2x128xi32>
    %cst_120 = arith.constant -1.000000e+30 : f32
    %410 = vector.broadcast %cst_120 : f32 to vector<2x128xf32>
    %411 = arith.select %409, %406, %410 : vector<2x128xi1>, vector<2x128xf32>
    %cst_121 = arith.constant dense<0xFF800000> : vector<2xf32>
    %412 = vector.multi_reduction <maximumf>, %411, %cst_121 [1] : vector<2x128xf32> to vector<2xf32>
    %413 = vector.shape_cast %412 : vector<2xf32> to vector<2x1xf32>
    %414 = vector.broadcast %413 : vector<2x1xf32> to vector<2x128xf32>
    %415 = arith.subf %411, %414 : vector<2x128xf32>
    %416 = math.exp %415 : vector<2x128xf32>
    %cst_122 = arith.constant dense<0.000000e+00> : vector<2xf32>
    %417 = vector.multi_reduction <add>, %416, %cst_122 [1] : vector<2x128xf32> to vector<2xf32>
    %418 = vector.shape_cast %417 : vector<2xf32> to vector<2x1xf32>
    %419 = vector.broadcast %418 : vector<2x1xf32> to vector<2x128xf32>
    %420 = arith.divf %416, %419 : vector<2x128xf32>
    %c0_123 = arith.constant 0 : index
    %c0_124 = arith.constant 0 : index
    %421 = vector.load %arg25[%c0_123, %c0_124] : memref<2x128xf32, #tpu.memory_space<vmem>>, vector<2x128xf32>
    tpu.vector_store %arg25[%c0_123, %c0_124], %420 {strides = array<i32>} : memref<2x128xf32, #tpu.memory_space<vmem>>, vector<2x128xf32>,
    return
  }
  func.func @transform_0(%arg0: i32) -> (i32, i32) {
    %c0_i32 = arith.constant 0 : i32
    %c0_i32_0 = arith.constant 0 : i32
    %c0_i32_1 = arith.constant 0 : i32
    return %c0_i32, %c0_i32_0 : i32, i32
  }
  func.func @transform_1(%arg0: i32) -> (i32, i32) {
    %c0_i32 = arith.constant 0 : i32
    %c0_i32_0 = arith.constant 0 : i32
    %c0_i32_1 = arith.constant 0 : i32
    return %c0_i32, %c0_i32_0 : i32, i32
  }
  func.func @transform_2(%arg0: i32) -> (i32, i32) {
    %c0_i32 = arith.constant 0 : i32
    %c0_i32_0 = arith.constant 0 : i32
    %c0_i32_1 = arith.constant 0 : i32
    return %c0_i32, %c0_i32_0 : i32, i32
  }
  func.func @transform_3(%arg0: i32) -> (i32, i32) {
    %c0_i32 = arith.constant 0 : i32
    %c0_i32_0 = arith.constant 0 : i32
    %c0_i32_1 = arith.constant 0 : i32
    return %c0_i32, %c0_i32_0 : i32, i32
  }
  func.func @transform_4(%arg0: i32) -> (i32, i32) {
    %c0_i32 = arith.constant 0 : i32
    %c0_i32_0 = arith.constant 0 : i32
    %c0_i32_1 = arith.constant 0 : i32
    return %c0_i32, %c0_i32_0 : i32, i32
  }
  func.func @transform_5(%arg0: i32) -> (i32, i32) {
    %c0_i32 = arith.constant 0 : i32
    %c0_i32_0 = arith.constant 0 : i32
    %c0_i32_1 = arith.constant 0 : i32
    return %c0_i32, %c0_i32_0 : i32, i32
  }
  func.func @transform_6(%arg0: i32) -> (i32, i32) {
    %c0_i32 = arith.constant 0 : i32
    %c0_i32_0 = arith.constant 0 : i32
    %c0_i32_1 = arith.constant 0 : i32
    return %c0_i32, %c0_i32_0 : i32, i32
  }
  func.func @transform_7(%arg0: i32) -> (i32, i32) {
    %c0_i32 = arith.constant 0 : i32
    %c0_i32_0 = arith.constant 0 : i32
    %c0_i32_1 = arith.constant 0 : i32
    return %c0_i32, %c0_i32_0 : i32, i32
  }
  func.func @transform_8(%arg0: i32) -> (i32, i32) {
    %c0_i32 = arith.constant 0 : i32
    %c0_i32_0 = arith.constant 0 : i32
    %c0_i32_1 = arith.constant 0 : i32
    return %c0_i32, %c0_i32_0 : i32, i32
  }
  func.func @transform_9(%arg0: i32) -> (i32, i32) {
    %c0_i32 = arith.constant 0 : i32
    %c0_i32_0 = arith.constant 0 : i32
    %c0_i32_1 = arith.constant 0 : i32
    return %c0_i32, %c0_i32_0 : i32, i32
  }
  func.func @transform_10(%arg0: i32) -> (i32, i32) {
    %c0_i32 = arith.constant 0 : i32
    %c0_i32_0 = arith.constant 0 : i32
    %c0_i32_1 = arith.constant 0 : i32
    return %c0_i32, %c0_i32_0 : i32, i32
  }
  func.func @transform_11(%arg0: i32) -> (i32, i32) {
    %c0_i32 = arith.constant 0 : i32
    %c0_i32_0 = arith.constant 0 : i32
    %c0_i32_1 = arith.constant 0 : i32
    return %c0_i32, %c0_i32_0 : i32, i32
  }
  func.func @transform_12(%arg0: i32) -> (i32, i32) {
    %c0_i32 = arith.constant 0 : i32
    %c0_i32_0 = arith.constant 0 : i32
    %c0_i32_1 = arith.constant 0 : i32
    return %c0_i32, %c0_i32_0 : i32, i32
  }
  func.func @transform_13(%arg0: i32) -> (i32, i32) {
    %c0_i32 = arith.constant 0 : i32
    %c0_i32_0 = arith.constant 0 : i32
    %c0_i32_1 = arith.constant 0 : i32
    return %c0_i32, %c0_i32_0 : i32, i32
  }
  func.func @transform_14(%arg0: i32) -> (i32, i32) {
    %c0_i32 = arith.constant 0 : i32
    %c0_i32_0 = arith.constant 0 : i32
    %c0_i32_1 = arith.constant 0 : i32
    return %c0_i32, %c0_i32_0 : i32, i32
  }
  func.func @transform_15(%arg0: i32) -> (i32, i32) {
    %c0_i32 = arith.constant 0 : i32
    %c0_i32_0 = arith.constant 0 : i32
    %c0_i32_1 = arith.constant 0 : i32
    return %c0_i32, %c0_i32_0 : i32, i32
  }
  func.func @transform_16(%arg0: i32) -> (i32, i32) {
    %c0_i32 = arith.constant 0 : i32
    %c0_i32_0 = arith.constant 0 : i32
    %c0_i32_1 = arith.constant 0 : i32
    return %c0_i32, %c0_i32_0 : i32, i32
  }
  func.func @transform_17(%arg0: i32) -> (i32, i32) {
    %c0_i32 = arith.constant 0 : i32
    %c0_i32_0 = arith.constant 0 : i32
    %c0_i32_1 = arith.constant 0 : i32
    return %c0_i32, %c0_i32_0 : i32, i32
  }
  func.func @transform_18(%arg0: i32) -> (i32, i32) {
    %c0_i32 = arith.constant 0 : i32
    %c0_i32_0 = arith.constant 0 : i32
    %c0_i32_1 = arith.constant 0 : i32
    return %c0_i32, %c0_i32_0 : i32, i32
  }
  func.func @transform_19(%arg0: i32) -> (i32, i32) {
    %c0_i32 = arith.constant 0 : i32
    %c0_i32_0 = arith.constant 0 : i32
    %c0_i32_1 = arith.constant 0 : i32
    return %c0_i32, %c0_i32_0 : i32, i32
  }
  func.func @transform_20(%arg0: i32) -> (i32, i32) {
    %c0_i32 = arith.constant 0 : i32
    %c0_i32_0 = arith.constant 0 : i32
    %c0_i32_1 = arith.constant 0 : i32
    return %c0_i32, %c0_i32_0 : i32, i32
  }
  func.func @transform_21(%arg0: i32) -> (i32, i32) {
    %c0_i32 = arith.constant 0 : i32
    %c0_i32_0 = arith.constant 0 : i32
    %c0_i32_1 = arith.constant 0 : i32
    return %c0_i32, %c0_i32_0 : i32, i32
  }
  func.func @transform_22(%arg0: i32) -> i32 {
    %c0_i32 = arith.constant 0 : i32
    %c0_i32_0 = arith.constant 0 : i32
    return %c0_i32 : i32
  }
  func.func @transform_23(%arg0: i32) -> i32 {
    %c0_i32 = arith.constant 0 : i32
    %c0_i32_0 = arith.constant 0 : i32
    return %c0_i32 : i32
  }
  func.func @transform_24(%arg0: i32) -> (i32, i32) {
    %c0_i32 = arith.constant 0 : i32
    %c0_i32_0 = arith.constant 0 : i32
    %c0_i32_1 = arith.constant 0 : i32
    return %c0_i32, %c0_i32_0 : i32, i32
  }
}

</mosaic_0001>

<llo_original>
// kernel: tpu_custom_call.1
$region0: #{tpu_custom_call.1}
  #allocation0 [shape = 'u32[]', space=smem, size = 0x4, offset = 0x4, fixed_abs, tag = 'smem constant byte address 0x4 - core index']
  #allocation1 [shape = 'u32[144,128]{1,0:T(1,128)}', space=vmem, size = 0x12000, scoped, tag = 'internal scratch']
  #allocation2 [shape = 'f32[1]{0:T(128)S(6)}', space=smem, size = 0x200, scoped, tag = 'scoped memory for tpu_custom_call.1']
  #allocation3 [shape = 'f32[1]{0:T(128)S(6)}', space=smem, size = 0x200, scoped, tag = 'scoped memory for tpu_custom_call.1']
  %s0 = inlined_call_operand.hbm [shape: f32[16,32], index: 0, kind: input, shape index: {}]
  %s1 = inlined_call_operand.hbm [shape: f32[32,32], index: 1, kind: input, shape index: {}]
  %s2 = inlined_call_operand.hbm [shape: f32[16,32], index: 2, kind: input, shape index: {}]
  %s3 = inlined_call_operand.hbm [shape: f32[3,32], index: 3, kind: input, shape index: {}]
  %s4 = inlined_call_operand.hbm [shape: f32[1,32], index: 4, kind: input, shape index: {}]
  %s5 = inlined_call_operand.hbm [shape: f32[32,32], index: 5, kind: input, shape index: {}]
  %s6 = inlined_call_operand.hbm [shape: f32[1,32], index: 6, kind: input, shape index: {}]
  %s7 = inlined_call_operand.hbm [shape: f32[1,32], index: 7, kind: input, shape index: {}]
  %s8 = inlined_call_operand.hbm [shape: f32[1,32], index: 8, kind: input, shape index: {}]
  %s9 = inlined_call_operand.hbm [shape: f32[2,16], index: 9, kind: input, shape index: {}]
  %s10 = inlined_call_operand.hbm [shape: f32[16,32], index: 10, kind: input, shape index: {}]
  %s11 = inlined_call_operand.vmem [shape: f32[32,32], index: 11, kind: input, shape index: {}]
  %s12 = inlined_call_operand.hbm [shape: f32[16,32], index: 12, kind: input, shape index: {}]
  %s13 = inlined_call_operand.hbm [shape: f32[3,32], index: 13, kind: input, shape index: {}]
  %s14 = inlined_call_operand.hbm [shape: f32[1,32], index: 14, kind: input, shape index: {}]
  %s15 = inlined_call_operand.vmem [shape: f32[32,32], index: 15, kind: input, shape index: {}]
  %s16 = inlined_call_operand.vmem [shape: f32[1,32], index: 16, kind: input, shape index: {}]
  %s17 = inlined_call_operand.vmem [shape: f32[1,32], index: 17, kind: input, shape index: {}]
  %s18 = inlined_call_operand.vmem [shape: f32[1,32], index: 18, kind: input, shape index: {}]
  %s19 = inlined_call_operand.vmem [shape: f32[2,16], index: 19, kind: input, shape index: {}]
  %s20 = inlined_call_operand.hbm [shape: f32[32,128], index: 20, kind: input, shape index: {}]
  %s21 = inlined_call_operand.vmem [shape: f32[1,128], index: 21, kind: input, shape index: {}]
  %s22 = inlined_call_operand.<no memory space> [shape: f32[1], index: 22, kind: input, shape index: {}]
  %s23 = inlined_call_operand.<no memory space> [shape: f32[1], index: 23, kind: input, shape index: {}]
  %s24 = inlined_call_operand.hbm [shape: f32[2,128], index: 24, kind: output, shape index: {}]
  %s25 = sld [smem:[#allocation0]]
  $region166: #{tpu_custom_call.1} parent=0
    _
  %s27 = ssub.s32 1, %s25
  %s28 = scalar_select 0, %s27, %s25
  %29 = sst [smem:[#allocation2]] %s22
  %30 = sst [smem:[#allocation3]] %s23
  $region1: #{tpu_custom_call.1} parent=0
    #allocation4 [shape = 'u8[8192]{0}', space=vmem, size = 0x2000, scoped, tag = 'input window, operand 0, single buffered']
    #allocation5 [shape = 's32[1]{0}', space=sflag, size = 0x4, scoped, tag = 'scoped memory for tpu_custom_call.1']
    #allocation6 [shape = 's32[1]{0}', space=sflag, size = 0x4, scoped, tag = 'scoped memory for tpu_custom_call.1']
    #allocation7 [shape = 'u8[16384]{0}', space=vmem, size = 0x4000, scoped, tag = 'input window, operand 1, single buffered']
    #allocation8 [shape = 's32[1]{0}', space=sflag, size = 0x4, scoped, tag = 'scoped memory for tpu_custom_call.1']
    #allocation9 [shape = 'u8[8192]{0}', space=vmem, size = 0x2000, scoped, tag = 'input window, operand 2, single buffered']
    #allocation10 [shape = 'u8[2048]{0}', space=vmem, size = 0x800, scoped, tag = 'input window, operand 3, single buffered']
    #allocation11 [shape = 's32[1]{0}', space=sflag, size = 0x4, scoped, tag = 'scoped memory for tpu_custom_call.1']
    #allocation12 [shape = 'u8[512]{0}', space=vmem, size = 0x400, scoped, tag = 'input window, operand 4, single buffered']
    #allocation13 [shape = 'u8[16384]{0}', space=vmem, size = 0x4000, scoped, tag = 'input window, operand 5, single buffered']
    #allocation14 [shape = 's32[1]{0}', space=sflag, size = 0x4, scoped, tag = 'scoped memory for tpu_custom_call.1']
    #allocation15 [shape = 'u8[512]{0}', space=vmem, size = 0x400, scoped, tag = 'input window, operand 6, single buffered']
    #allocation16 [shape = 'u8[512]{0}', space=vmem, size = 0x400, scoped, tag = 'input window, operand 7, single buffered']
    #allocation17 [shape = 's32[1]{0}', space=sflag, size = 0x4, scoped, tag = 'scoped memory for tpu_custom_call.1']
    #allocation18 [shape = 'u8[512]{0}', space=vmem, size = 0x400, scoped, tag = 'input window, operand 8, single buffered']
    #allocation19 [shape = 'u8[1024]{0}', space=vmem, size = 0x400, scoped, tag = 'input window, operand 9, single buffered']
    #allocation20 [shape = 's32[1]{0}', space=sflag, size = 0x4, scoped, tag = 'scoped memory for tpu_custom_call.1']
    #allocation21 [shape = 'u8[8192]{0}', space=vmem, size = 0x2000, scoped, tag = 'input window, operand 10, single buffered']
    #allocation22 [shape = 'u8[8192]{0}', space=vmem, size = 0x2000, scoped, tag = 'input window, operand 12, single buffered']
    #allocation23 [shape = 's32[1]{0}', space=sflag, size = 0x4, scoped, tag = 'scoped memory for tpu_custom_call.1']
    #allocation24 [shape = 'u8[2048]{0}', space=vmem, size = 0x800, scoped, tag = 'input window, operand 13, single buffered']
    #allocation25 [shape = 'u8[512]{0}', space=vmem, size = 0x400, scoped, tag = 'input window, operand 14, single buffered']
    #allocation26 [shape = 's32[1]{0}', space=sflag, size = 0x4, scoped, tag = 'scoped memory for tpu_custom_call.1']
    #allocation27 [shape = 'u8[16384]{0}', space=vmem, size = 0x4000, scoped, tag = 'input window, operand 20, single buffered']
    #allocation28 [shape = 'u8[1024]{0}', space=vmem, size = 0x400, scoped, tag = 'output window, operand 0, single buffered']
    %31 = vsyncpa [#allocation5], 0
    %32 = vsyncpa [#allocation8], 0
    %33 = vsyncpa [#allocation11], 0
    %34 = vsyncpa [#allocation14], 0
    %35 = vsyncpa [#allocation17], 0
    %36 = vsyncpa [#allocation20], 0
    %37 = vsyncpa [#allocation23], 0
    %38 = vsyncpa [#allocation26], 0
    %39 = vsyncpa [#allocation6], 0
    // Predicated region
    $region2: #{tpu_custom_call.1} parent=1 // pred_check
      _
    $region3: #{tpu_custom_call.1} parent=1 // pred_check_branch
      %41 = sbr.rel (0) target = $region5
    $region4: #{tpu_custom_call.1} parent=1 // pred_region
      %s43 = ssub.s32 256, 256
      %44 = vsyncadd [#allocation5], %s43
      %s45 = sshll.u32 [#allocation4], 4
      %s46 = int_to_ptr.vmem [resolvable:$true] %s45
      %51 = dma.hbm_to_vmem [thread:$0]  %s0, 256, %s46, [#allocation5], 128, 128, 8
    $region5: #{tpu_custom_call.1} parent=1 // pred_fallthru
      _
    // Predicated region
    $region6: #{tpu_custom_call.1} parent=1 // pred_check
      _
    $region7: #{tpu_custom_call.1} parent=1 // pred_check_branch
      %53 = sbr.rel (0) target = $region9
    $region8: #{tpu_custom_call.1} parent=1 // pred_region
      %s55 = ssub.s32 512, 512
      %56 = vsyncadd [#allocation8], %s55
      %s57 = sshll.u32 [#allocation7], 4
      %s58 = int_to_ptr.vmem [resolvable:$true] %s57
      %63 = dma.hbm_to_vmem [thread:$0]  %s1, 512, %s58, [#allocation8], 128, 128, 8
    $region9: #{tpu_custom_call.1} parent=1 // pred_fallthru
      _
    // Predicated region
    $region10: #{tpu_custom_call.1} parent=1 // pred_check
      _
    $region11: #{tpu_custom_call.1} parent=1 // pred_check_branch
      %65 = sbr.rel (0) target = $region13
    $region12: #{tpu_custom_call.1} parent=1 // pred_region
      %s67 = ssub.s32 256, 256
      %68 = vsyncadd [#allocation8], %s67
      %s69 = sshll.u32 [#allocation9], 4
      %s70 = int_to_ptr.vmem [resolvable:$true] %s69
      %75 = dma.hbm_to_vmem [thread:$0]  %s2, 256, %s70, [#allocation8], 128, 128, 8
    $region13: #{tpu_custom_call.1} parent=1 // pred_fallthru
      _
    // Predicated region
    $region14: #{tpu_custom_call.1} parent=1 // pred_check
      _
    $region15: #{tpu_custom_call.1} parent=1 // pred_check_branch
      %77 = sbr.rel (0) target = $region17
    $region16: #{tpu_custom_call.1} parent=1 // pred_region
      %s79 = ssub.s32 64, 64
      %80 = vsyncadd [#allocation11], %s79
      %s82 = sshll.u32 [#allocation10], 4
      %s83 = int_to_ptr.vmem [resolvable:$true] %s82
      %85 = dma.hbm_to_vmem [thread:$0]  %s3, 64, %s83, [#allocation11]
    $region17: #{tpu_custom_call.1} parent=1 // pred_fallthru
      _
    // Predicated region
    $region18: #{tpu_custom_call.1} parent=1 // pred_check
      _
    $region19: #{tpu_custom_call.1} parent=1 // pred_check_branch
      %87 = sbr.rel (0) target = $region21
    $region20: #{tpu_custom_call.1} parent=1 // pred_region
      %s89 = ssub.s32 16, 16
      %90 = vsyncadd [#allocation11], %s89
      %s92 = sshll.u32 [#allocation12], 4
      %s93 = int_to_ptr.vmem [resolvable:$true] %s92
      %95 = dma.hbm_to_vmem [thread:$0]  %s4, 16, %s93, [#allocation11]
    $region21: #{tpu_custom_call.1} parent=1 // pred_fallthru
      _
    // Predicated region
    $region22: #{tpu_custom_call.1} parent=1 // pred_check
      _
    $region23: #{tpu_custom_call.1} parent=1 // pred_check_branch
      %97 = sbr.rel (0) target = $region25
    $region24: #{tpu_custom_call.1} parent=1 // pred_region
      %s99 = ssub.s32 512, 512
      %100 = vsyncadd [#allocation14], %s99
      %s101 = sshll.u32 [#allocation13], 4
      %s102 = int_to_ptr.vmem [resolvable:$true] %s101
      %107 = dma.hbm_to_vmem [thread:$0]  %s5, 512, %s102, [#allocation14], 128, 128, 8
    $region25: #{tpu_custom_call.1} parent=1 // pred_fallthru
      _
    // Predicated region
    $region26: #{tpu_custom_call.1} parent=1 // pred_check
      _
    $region27: #{tpu_custom_call.1} parent=1 // pred_check_branch
      %109 = sbr.rel (0) target = $region29
    $region28: #{tpu_custom_call.1} parent=1 // pred_region
      %s111 = ssub.s32 16, 16
      %112 = vsyncadd [#allocation14], %s111
      %s114 = sshll.u32 [#allocation15], 4
      %s115 = int_to_ptr.vmem [resolvable:$true] %s114
      %117 = dma.hbm_to_vmem [thread:$0]  %s6, 16, %s115, [#allocation14]
    $region29: #{tpu_custom_call.1} parent=1 // pred_fallthru
      _
    // Predicated region
    $region30: #{tpu_custom_call.1} parent=1 // pred_check
      _
    $region31: #{tpu_custom_call.1} parent=1 // pred_check_branch
      %119 = sbr.rel (0) target = $region33
    $region32: #{tpu_custom_call.1} parent=1 // pred_region
      %s121 = ssub.s32 16, 16
      %122 = vsyncadd [#allocation17], %s121
      %s124 = sshll.u32 [#allocation16], 4
      %s125 = int_to_ptr.vmem [resolvable:$true] %s124
      %127 = dma.hbm_to_vmem [thread:$0]  %s7, 16, %s125, [#allocation17]
    $region33: #{tpu_custom_call.1} parent=1 // pred_fallthru
      _
    // Predicated region
    $region34: #{tpu_custom_call.1} parent=1 // pred_check
      _
    $region35: #{tpu_custom_call.1} parent=1 // pred_check_branch
      %129 = sbr.rel (0) target = $region37
    $region36: #{tpu_custom_call.1} parent=1 // pred_region
      %s131 = ssub.s32 16, 16
      %132 = vsyncadd [#allocation17], %s131
      %s134 = sshll.u32 [#allocation18], 4
      %s135 = int_to_ptr.vmem [resolvable:$true] %s134
      %137 = dma.hbm_to_vmem [thread:$0]  %s8, 16, %s135, [#allocation17]
    $region37: #{tpu_custom_call.1} parent=1 // pred_fallthru
      _
    // Predicated region
    $region38: #{tpu_custom_call.1} parent=1 // pred_check
      _
    $region39: #{tpu_custom_call.1} parent=1 // pred_check_branch
      %139 = sbr.rel (0) target = $region41
    $region40: #{tpu_custom_call.1} parent=1 // pred_region
      %s141 = ssub.s32 32, 32
      %142 = vsyncadd [#allocation20], %s141
      %s144 = sshll.u32 [#allocation19], 4
      %s145 = int_to_ptr.vmem [resolvable:$true] %s144
      %147 = dma.hbm_to_vmem [thread:$0]  %s9, 32, %s145, [#allocation20]
    $region41: #{tpu_custom_call.1} parent=1 // pred_fallthru
      _
    // Predicated region
    $region42: #{tpu_custom_call.1} parent=1 // pred_check
      _
    $region43: #{tpu_custom_call.1} parent=1 // pred_check_branch
      %149 = sbr.rel (0) target = $region45
    $region44: #{tpu_custom_call.1} parent=1 // pred_region
      %s151 = ssub.s32 256, 256
      %152 = vsyncadd [#allocation20], %s151
      %s153 = sshll.u32 [#allocation21], 4
      %s154 = int_to_ptr.vmem [resolvable:$true] %s153
      %159 = dma.hbm_to_vmem [thread:$0]  %s10, 256, %s154, [#allocation20], 128, 128, 8
    $region45: #{tpu_custom_call.1} parent=1 // pred_fallthru
      _
    // Predicated region
    $region46: #{tpu_custom_call.1} parent=1 // pred_check
      _
    $region47: #{tpu_custom_call.1} parent=1 // pred_check_branch
      %161 = sbr.rel (0) target = $region49
    $region48: #{tpu_custom_call.1} parent=1 // pred_region
      _
    $region49: #{tpu_custom_call.1} parent=1 // pred_fallthru
      _
    // Predicated region
    $region50: #{tpu_custom_call.1} parent=1 // pred_check
      _
    $region51: #{tpu_custom_call.1} parent=1 // pred_check_branch
      %163 = sbr.rel (0) target = $region53
    $region52: #{tpu_custom_call.1} parent=1 // pred_region
      %s165 = ssub.s32 256, 256
      %166 = vsyncadd [#allocation23], %s165
      %s167 = sshll.u32 [#allocation22], 4
      %s168 = int_to_ptr.vmem [resolvable:$true] %s167
      %173 = dma.hbm_to_vmem [thread:$0]  %s12, 256, %s168, [#allocation23], 128, 128, 8
    $region53: #{tpu_custom_call.1} parent=1 // pred_fallthru
      _
    // Predicated region
    $region54: #{tpu_custom_call.1} parent=1 // pred_check
      _
    $region55: #{tpu_custom_call.1} parent=1 // pred_check_branch
      %175 = sbr.rel (0) target = $region57
    $region56: #{tpu_custom_call.1} parent=1 // pred_region
      %s177 = ssub.s32 64, 64
      %178 = vsyncadd [#allocation23], %s177
      %s180 = sshll.u32 [#allocation24], 4
      %s181 = int_to_ptr.vmem [resolvable:$true] %s180
      %183 = dma.hbm_to_vmem [thread:$0]  %s13, 64, %s181, [#allocation23]
    $region57: #{tpu_custom_call.1} parent=1 // pred_fallthru
      _
    // Predicated region
    $region58: #{tpu_custom_call.1} parent=1 // pred_check
      _
    $region59: #{tpu_custom_call.1} parent=1 // pred_check_branch
      %185 = sbr.rel (0) target = $region61
    $region60: #{tpu_custom_call.1} parent=1 // pred_region
      %s187 = ssub.s32 16, 16
      %188 = vsyncadd [#allocation26], %s187
      %s190 = sshll.u32 [#allocation25], 4
      %s191 = int_to_ptr.vmem [resolvable:$true] %s190
      %193 = dma.hbm_to_vmem [thread:$0]  %s14, 16, %s191, [#allocation26]
    $region61: #{tpu_custom_call.1} parent=1 // pred_fallthru
      _
    // Predicated region
    $region62: #{tpu_custom_call.1} parent=1 // pred_check
      _
    $region63: #{tpu_custom_call.1} parent=1 // pred_check_branch
      %195 = sbr.rel (0) target = $region65
    $region64: #{tpu_custom_call.1} parent=1 // pred_region
      _
    $region65: #{tpu_custom_call.1} parent=1 // pred_fallthru
      _
    // Predicated region
    $region66: #{tpu_custom_call.1} parent=1 // pred_check
      _
    $region67: #{tpu_custom_call.1} parent=1 // pred_check_branch
      %197 = sbr.rel (0) target = $region69
    $region68: #{tpu_custom_call.1} parent=1 // pred_region
      _
    $region69: #{tpu_custom_call.1} parent=1 // pred_fallthru
      _
    // Predicated region
    $region70: #{tpu_custom_call.1} parent=1 // pred_check
      _
    $region71: #{tpu_custom_call.1} parent=1 // pred_check_branch
      %199 = sbr.rel (0) target = $region73
    $region72: #{tpu_custom_call.1} parent=1 // pred_region
      _
    $region73: #{tpu_custom_call.1} parent=1 // pred_fallthru
      _
    // Predicated region
    $region74: #{tpu_custom_call.1} parent=1 // pred_check
      _
    $region75: #{tpu_custom_call.1} parent=1 // pred_check_branch
      %201 = sbr.rel (0) target = $region77
    $region76: #{tpu_custom_call.1} parent=1 // pred_region
      _
    $region77: #{tpu_custom_call.1} parent=1 // pred_fallthru
      _
    // Predicated region
    $region78: #{tpu_custom_call.1} parent=1 // pred_check
      _
    $region79: #{tpu_custom_call.1} parent=1 // pred_check_branch
      %203 = sbr.rel (0) target = $region81
    $region80: #{tpu_custom_call.1} parent=1 // pred_region
      _
    $region81: #{tpu_custom_call.1} parent=1 // pred_fallthru
      _
    // Predicated region
    $region82: #{tpu_custom_call.1} parent=1 // pred_check
      _
    $region83: #{tpu_custom_call.1} parent=1 // pred_check_branch
      %205 = sbr.rel (0) target = $region85
    $region84: #{tpu_custom_call.1} parent=1 // pred_region
      %s207 = ssub.s32 512, 512
      %208 = vsyncadd [#allocation26], %s207
      %s209 = sshll.u32 [#allocation27], 4
      %s210 = int_to_ptr.vmem [resolvable:$true] %s209
      %215 = dma.hbm_to_vmem [thread:$0]  %s20, 512, %s210, [#allocation26], 128, 128, 8
    $region85: #{tpu_custom_call.1} parent=1 // pred_fallthru
      _
    // Predicated region
    $region86: #{tpu_custom_call.1} parent=1 // pred_check
      _
    $region87: #{tpu_custom_call.1} parent=1 // pred_check_branch
      %217 = sbr.rel (0) target = $region89
    $region88: #{tpu_custom_call.1} parent=1 // pred_region
      _
    $region89: #{tpu_custom_call.1} parent=1 // pred_fallthru
      _
    // Predicated region
    $region90: #{tpu_custom_call.1} parent=1 // pred_check
      _
    $region91: #{tpu_custom_call.1} parent=1 // pred_check_branch
      %219 = sbr.rel (0) target = $region93
    $region92: #{tpu_custom_call.1} parent=1 // pred_region
      _
    $region93: #{tpu_custom_call.1} parent=1 // pred_fallthru
      _
    // Predicated region
    $region94: #{tpu_custom_call.1} parent=1 // pred_check
      _
    $region95: #{tpu_custom_call.1} parent=1 // pred_check_branch
      %221 = sbr.rel (0) target = $region97
    $region96: #{tpu_custom_call.1} parent=1 // pred_region
      _
    $region97: #{tpu_custom_call.1} parent=1 // pred_fallthru
      _
    // Predicated region
    $region98: #{tpu_custom_call.1} parent=1 // pred_check
      _
    $region99: #{tpu_custom_call.1} parent=1 // pred_check_branch
      %223 = sbr.rel (0) target = $region101
    $region100: #{tpu_custom_call.1} parent=1 // pred_region
      %224 = dma.done [#allocation5], 256
    $region101: #{tpu_custom_call.1} parent=1 // pred_fallthru
      _
    // Predicated region
    $region102: #{tpu_custom_call.1} parent=1 // pred_check
      _
    $region103: #{tpu_custom_call.1} parent=1 // pred_check_branch
      %226 = sbr.rel (0) target = $region105
    $region104: #{tpu_custom_call.1} parent=1 // pred_region
      %227 = dma.done [#allocation8], 512
    $region105: #{tpu_custom_call.1} parent=1 // pred_fallthru
      _
    // Predicated region
    $region106: #{tpu_custom_call.1} parent=1 // pred_check
      _
    $region107: #{tpu_custom_call.1} parent=1 // pred_check_branch
      %229 = sbr.rel (0) target = $region109
    $region108: #{tpu_custom_call.1} parent=1 // pred_region
      %230 = dma.done [#allocation8], 256
    $region109: #{tpu_custom_call.1} parent=1 // pred_fallthru
      _
    // Predicated region
    $region110: #{tpu_custom_call.1} parent=1 // pred_check
      _
    $region111: #{tpu_custom_call.1} parent=1 // pred_check_branch
      %232 = sbr.rel (0) target = $region113
    $region112: #{tpu_custom_call.1} parent=1 // pred_region
      %233 = dma.done [#allocation11], 64
    $region113: #{tpu_custom_call.1} parent=1 // pred_fallthru
      _
    // Predicated region
    $region114: #{tpu_custom_call.1} parent=1 // pred_check
      _
    $region115: #{tpu_custom_call.1} parent=1 // pred_check_branch
      %235 = sbr.rel (0) target = $region117
    $region116: #{tpu_custom_call.1} parent=1 // pred_region
      %236 = dma.done [#allocation11], 16
    $region117: #{tpu_custom_call.1} parent=1 // pred_fallthru
      _
    // Predicated region
    $region118: #{tpu_custom_call.1} parent=1 // pred_check
      _
    $region119: #{tpu_custom_call.1} parent=1 // pred_check_branch
      %238 = sbr.rel (0) target = $region121
    $region120: #{tpu_custom_call.1} parent=1 // pred_region
      %239 = dma.done [#allocation14], 512
    $region121: #{tpu_custom_call.1} parent=1 // pred_fallthru
      _
    // Predicated region
    $region122: #{tpu_custom_call.1} parent=1 // pred_check
      _
    $region123: #{tpu_custom_call.1} parent=1 // pred_check_branch
      %241 = sbr.rel (0) target = $region125
    $region124: #{tpu_custom_call.1} parent=1 // pred_region
      %242 = dma.done [#allocation14], 16
    $region125: #{tpu_custom_call.1} parent=1 // pred_fallthru
      _
    // Predicated region
    $region126: #{tpu_custom_call.1} parent=1 // pred_check
      _
    $region127: #{tpu_custom_call.1} parent=1 // pred_check_branch
      %244 = sbr.rel (0) target = $region129
    $region128: #{tpu_custom_call.1} parent=1 // pred_region
      %245 = dma.done [#allocation17], 16
    $region129: #{tpu_custom_call.1} parent=1 // pred_fallthru
      _
    // Predicated region
    $region130: #{tpu_custom_call.1} parent=1 // pred_check
      _
    $region131: #{tpu_custom_call.1} parent=1 // pred_check_branch
      %247 = sbr.rel (0) target = $region133
    $region132: #{tpu_custom_call.1} parent=1 // pred_region
      %248 = dma.done [#allocation17], 16
    $region133: #{tpu_custom_call.1} parent=1 // pred_fallthru
      _
    // Predicated region
    $region134: #{tpu_custom_call.1} parent=1 // pred_check
      _
    $region135: #{tpu_custom_call.1} parent=1 // pred_check_branch
      %250 = sbr.rel (0) target = $region137
    $region136: #{tpu_custom_call.1} parent=1 // pred_region
      %251 = dma.done [#allocation20], 32
    $region137: #{tpu_custom_call.1} parent=1 // pred_fallthru
      _
    // Predicated region
    $region138: #{tpu_custom_call.1} parent=1 // pred_check
      _
    $region139: #{tpu_custom_call.1} parent=1 // pred_check_branch
      %253 = sbr.rel (0) target = $region141
    $region140: #{tpu_custom_call.1} parent=1 // pred_region
      %254 = dma.done [#allocation20], 256
    $region141: #{tpu_custom_call.1} parent=1 // pred_fallthru
      _
    // Predicated region
    $region142: #{tpu_custom_call.1} parent=1 // pred_check
      _
    $region143: #{tpu_custom_call.1} parent=1 // pred_check_branch
      %256 = sbr.rel (0) target = $region145
    $region144: #{tpu_custom_call.1} parent=1 // pred_region
      %257 = dma.done [#allocation23], 256
    $region145: #{tpu_custom_call.1} parent=1 // pred_fallthru
      _
    // Predicated region
    $region146: #{tpu_custom_call.1} parent=1 // pred_check
      _
    $region147: #{tpu_custom_call.1} parent=1 // pred_check_branch
      %259 = sbr.rel (0) target = $region149
    $region148: #{tpu_custom_call.1} parent=1 // pred_region
      %260 = dma.done [#allocation23], 64
    $region149: #{tpu_custom_call.1} parent=1 // pred_fallthru
      _
    // Predicated region
    $region150: #{tpu_custom_call.1} parent=1 // pred_check
      _
    $region151: #{tpu_custom_call.1} parent=1 // pred_check_branch
      %262 = sbr.rel (0) target = $region153
    $region152: #{tpu_custom_call.1} parent=1 // pred_region
      %263 = dma.done [#allocation26], 16
    $region153: #{tpu_custom_call.1} parent=1 // pred_fallthru
      _
    // Predicated region
    $region154: #{tpu_custom_call.1} parent=1 // pred_check
      _
    $region155: #{tpu_custom_call.1} parent=1 // pred_check_branch
      %265 = sbr.rel (0) target = $region157
    $region156: #{tpu_custom_call.1} parent=1 // pred_region
      %266 = dma.done [#allocation26], 512
    $region157: #{tpu_custom_call.1} parent=1 // pred_fallthru
      _
    %s267 = sld [smem:[#allocation2]]
    %v268 = vld [vmem:[#allocation4] sm:$0xff]
    %v269 = vld [vmem:[#allocation4 + $0x8] sm:$0xff]
    %v270 = vld [vmem:[#allocation7] sm:$0xff]
    %v271 = vld [vmem:[#allocation7 + $0x8] sm:$0xff]
    %v272 = vld [vmem:[#allocation7 + $0x10] sm:$0xff]
    %v273 = vld [vmem:[#allocation7 + $0x18] sm:$0xff]
    %v274 = vld [vmem:[#allocation9] sm:$0xff]
    %v275 = vld [vmem:[#allocation9 + $0x8] sm:$0xff]
    %v276 = vld [vmem:[#allocation10] sm:$0x7]
    %v277 = vld [vmem:[#allocation12] sm:$0x1]
    %v278 = vld [vmem:[#allocation13] sm:$0xff]
    %v279 = vld [vmem:[#allocation13 + $0x8] sm:$0xff]
    %v280 = vld [vmem:[#allocation13 + $0x10] sm:$0xff]
    %v281 = vld [vmem:[#allocation13 + $0x18] sm:$0xff]
    %v282 = vld [vmem:[#allocation15] sm:$0x1]
    %vm283 = vcmask 261120
    %v285 = vsel %vm283, %v268, 0
    %v288 = vsel %vm283, %v269, 0
    %290 = vmatprep.subr.mxu0 0.0
    %291 = vmatpush1.msra.mxu0 %v270
    %292 = vmatprep.subr.mxu0 0.0
    %293 = vmatpush1.msra.mxu0 %v271
    %294 = vmatprep.subr.mxu0 0.0
    %295 = vmatpush1.msra.mxu0 %v272
    %296 = vmatprep.subr.mxu0 0.0
    %297 = vmatpush1.msra.mxu0 %v273
    %298 = vmatprep.subr.mxu0 0.0
    %299 = vmatpush1.msra.mxu0 0.0
    %300 = vmatprep.subr.mxu0 0.0
    %301 = vmatpush1.msra.mxu0 0.0
    %302 = vmatprep.subr.mxu0 0.0
    %303 = vmatpush1.msra.mxu0 0.0
    %304 = vmatprep.subr.mxu0 0.0
    %305 = vmatpush1.msra.mxu0 0.0
    %306 = vmatprep.subr.mxu0 0.0
    %307 = vmatpush1.msra.mxu0 0.0
    %308 = vmatprep.subr.mxu0 0.0
    %309 = vmatpush1.msra.mxu0 0.0
    %310 = vmatprep.subr.mxu0 0.0
    %311 = vmatpush1.msra.mxu0 0.0
    %312 = vmatprep.subr.mxu0 0.0
    %313 = vmatpush1.msra.mxu0 0.0
    %314 = vmatprep.subr.mxu0 0.0
    %315 = vmatpush1.msra.mxu0 0.0
    %316 = vmatprep.subr.mxu0 0.0
    %317 = vmatpush1.msra.mxu0 0.0
    %318 = vmatprep.subr.mxu0 0.0
    %319 = vmatpush1.msra.mxu0 0.0
    %320 = vmatprep.subr.mxu0 0.0
    %321 = vmatpush1.msra.mxu0 0.0
    %322 = vmatprep.subr.mxu0 0.0
    %323 = vmatpush1.msra.mxu0 0.0
    %324 = vmatprep.subr.mxu0 0.0
    %325 = vmatpush1.msra.mxu0 0.0
    %326 = vmatprep.subr.mxu0 0.0
    %327 = vmatpush1.msra.mxu0 0.0
    %328 = vmatprep.subr.mxu0 0.0
    %329 = vmatpush1.msra.mxu0 0.0
    %330 = vmatprep.subr.mxu0 0.0
    %331 = vmatpush1.msra.mxu0 0.0
    %332 = vmatprep.subr.mxu0 0.0
    %333 = vmatpush1.msra.mxu0 0.0
    %334 = vmatprep.subr.mxu0 0.0
    %335 = vmatpush1.msra.mxu0 0.0
    %336 = vmatprep.subr.mxu0 0.0
    %337 = vmatpush1.msra.mxu0 0.0
    %338 = vmatprep.subr.mxu0 0.0
    %339 = vmatpush1.msra.mxu0 0.0
    %340 = vmatprep.subr.mxu0 0.0
    %341 = vmatpush1.msra.mxu0 0.0
    %342 = vmatprep.subr.mxu0 0.0
    %343 = vmatpush1.msra.mxu0 0.0
    %344 = vmatprep.subr.mxu0 0.0
    %345 = vmatpush1.msra.mxu0 0.0
    %346 = vmatprep.subr.mxu0 0.0
    %347 = vmatpush1.msra.mxu0 0.0
    %348 = vmatprep.subr.mxu0 0.0
    %349 = vmatpush1.msra.mxu0 0.0
    %350 = vmatprep.subr.mxu0 0.0
    %351 = vmatpush1.msra.mxu0 0.0
    %352 = vmatprep.subr.mxu0 0.0
    %353 = vmatpush1.msra.mxu0 0.0
    %354 = vmatprep.mubr.f32.mxu0 0.0
    %355 = vmatmul.mubr.f32.gmra.mrb[0].mxu0 %v285
    %v356 = vpop.f32.mrb[0].mxu0
    %v357 = vadd.f32 %v274, %v356
    %v358 = vpop.f32.mrb[0].mxu0
    %359 = vmatprep.mubr.f32.mxu0 0.0
    %360 = vmatmul.mubr.f32.gmra.mrb[0].mxu0 %v288
    %v361 = vpop.f32.mrb[0].mxu0
    %v362 = vadd.f32 %v275, %v361
    %v363 = vpop.f32.mrb[0].mxu0
    %364 = vdwg.mxu0
    %v365 = vlaneseq
    %v366 = vshrl.u32 %v365, 7
    %v367 = vsub.s32 0, %v366
    %v368 = vrot.slane %v276, %v367
    %v369 = vadd.f32 %v357, %v368
    %v370 = vadd.f32 %v362, %v368
    %v372 = vlaneseq
    %v373 = vshrl.u32 %v372, 7
    %v374 = vsub.s32 0, %v373
    %v375 = vrot.slane %v277, %v374
    %v377 = vmul.f32 %v369, %v375
    %v378 = vmul.f32 %v370, %v375
    %v379 = vsel %vm283, %v377, 0.0
    %380 = vadd.xlane.f32.xlu0 %v379
    %v381 = vpop.xlane.xlu0 %380
    %v382 = vsel %vm283, %v378, 0.0
    %383 = vadd.xlane.f32.xlu0 %v382
    %v384 = vpop.xlane.xlu0 %383
    %v385 = vstv %s267
    %v386 = vadd.f32 %v381, %v385
    %v387 = vadd.f32 %v384, %v385
    %v388 = vxor.u32 %v386, 2147483648
    %v389 = vxor.u32 %v387, 2147483648
    %v390 = vmul.f32 %v388, 1.442695
    %v391 = vpow.pop %v390
    %v392 = vmul.f32 %v389, 1.442695
    %v393 = vpow.pop %v392
    %v394 = vadd.f32 %v391, 1.0
    %v395 = vadd.f32 %v393, 1.0
    %v396 = vrcp.pop %v394
    %v397 = vmul.f32 1.0, %v396
    %v398 = vrcp.pop %v395
    %v399 = vmul.f32 1.0, %v398
    %vm400 = vcmp.lt.f32.partialorder 0.0, 1.0
    %v401 = vsel %vm400, 1, 0
    %v402 = vcvt.s32.f32 %v401
    %v403 = vmul.f32 %v397, %v402
    %v404 = vmul.f32 %v399, %v402
    %v405 = vadd.f32 %v403, 0.0
    %v406 = vadd.f32 %v404, 0.0
    %vm407 = vcmp.gt.f32.partialorder %v405, 0.9
    %vm408 = vcmp.gt.f32.partialorder %v406, 0.9
    %v409 = vsel %vm407, 1, 0
    %v410 = vsel %vm408, 1, 0
    %v411 = vcvt.s32.f32 %v409
    %v412 = vcvt.s32.f32 %v410
    %v413 = vmul.f32 %v411, %v402
    %v414 = vmul.f32 %v412, %v402
    %vm415 = vcmp.le.f32.partialorder %v405, 0.9
    %vm416 = vcmp.le.f32.partialorder %v406, 0.9
    %v417 = vsel %vm415, 1, 0
    %v418 = vsel %vm416, 1, 0
    %v419 = vcvt.s32.f32 %v417
    %v420 = vcvt.s32.f32 %v418
    %v421 = vmul.f32 %v419, %v402
    %v422 = vmul.f32 %v420, %v402
    %v423 = vmul.f32 %v397, %v421
    %v424 = vmul.f32 %v399, %v422
    %v425 = vadd.f32 %v423, 0.0
    %v426 = vadd.f32 %v424, 0.0
    %v427 = vsub.f32 1.0, %v425
    %v428 = vsub.f32 1.0, %v426
    %v429 = vmul.f32 %v413, %v427
    %v430 = vmul.f32 %v414, %v428
    %v431 = vadd.f32 %v429, 0.0
    %v432 = vadd.f32 %v430, 0.0
    %v433 = vmul.f32 %v413, %v431
    %v434 = vmul.f32 %v414, %v432
    %v435 = vadd.f32 %v425, %v433
    %v436 = vadd.f32 %v426, %v434
    %v437 = vadd.f32 %v423, %v433
    %v438 = vadd.f32 %v424, %v434
    %v440 = vlaneseq
    %v441 = vshrl.u32 %v440, 7
    %v442 = vsub.s32 0, %v441
    %v443 = vrot.slane %v282, %v442
    %v446 = vsel %vm283, %v369, 0
    %v449 = vsel %vm283, %v370, 0
    %451 = vmatprep.subr.mxu0 0.0
    %452 = vmatpush1.msra.mxu0 %v278
    %453 = vmatprep.subr.mxu0 0.0
    %454 = vmatpush1.msra.mxu0 %v279
    %455 = vmatprep.subr.mxu0 0.0
    %456 = vmatpush1.msra.mxu0 %v280
    %457 = vmatprep.subr.mxu0 0.0
    %458 = vmatpush1.msra.mxu0 %v281
    %459 = vmatprep.subr.mxu0 0.0
    %460 = vmatpush1.msra.mxu0 0.0
    %461 = vmatprep.subr.mxu0 0.0
    %462 = vmatpush1.msra.mxu0 0.0
    %463 = vmatprep.subr.mxu0 0.0
    %464 = vmatpush1.msra.mxu0 0.0
    %465 = vmatprep.subr.mxu0 0.0
    %466 = vmatpush1.msra.mxu0 0.0
    %467 = vmatprep.subr.mxu0 0.0
    %468 = vmatpush1.msra.mxu0 0.0
    %469 = vmatprep.subr.mxu0 0.0
    %470 = vmatpush1.msra.mxu0 0.0
    %471 = vmatprep.subr.mxu0 0.0
    %472 = vmatpush1.msra.mxu0 0.0
    %473 = vmatprep.subr.mxu0 0.0
    %474 = vmatpush1.msra.mxu0 0.0
    %475 = vmatprep.subr.mxu0 0.0
    %476 = vmatpush1.msra.mxu0 0.0
    %477 = vmatprep.subr.mxu0 0.0
    %478 = vmatpush1.msra.mxu0 0.0
    %479 = vmatprep.subr.mxu0 0.0
    %480 = vmatpush1.msra.mxu0 0.0
    %481 = vmatprep.subr.mxu0 0.0
    %482 = vmatpush1.msra.mxu0 0.0
    %483 = vmatprep.subr.mxu0 0.0
    %484 = vmatpush1.msra.mxu0 0.0
    %485 = vmatprep.subr.mxu0 0.0
    %486 = vmatpush1.msra.mxu0 0.0
    %487 = vmatprep.subr.mxu0 0.0
    %488 = vmatpush1.msra.mxu0 0.0
    %489 = vmatprep.subr.mxu0 0.0
    %490 = vmatpush1.msra.mxu0 0.0
    %491 = vmatprep.subr.mxu0 0.0
    %492 = vmatpush1.msra.mxu0 0.0
    %493 = vmatprep.subr.mxu0 0.0
    %494 = vmatpush1.msra.mxu0 0.0
    %495 = vmatprep.subr.mxu0 0.0
    %496 = vmatpush1.msra.mxu0 0.0
    %497 = vmatprep.subr.mxu0 0.0
    %498 = vmatpush1.msra.mxu0 0.0
    %499 = vmatprep.subr.mxu0 0.0
    %500 = vmatpush1.msra.mxu0 0.0
    %501 = vmatprep.subr.mxu0 0.0
    %502 = vmatpush1.msra.mxu0 0.0
    %503 = vmatprep.subr.mxu0 0.0
    %504 = vmatpush1.msra.mxu0 0.0
    %505 = vmatprep.subr.mxu0 0.0
    %506 = vmatpush1.msra.mxu0 0.0
    %507 = vmatprep.subr.mxu0 0.0
    %508 = vmatpush1.msra.mxu0 0.0
    %509 = vmatprep.subr.mxu0 0.0
    %510 = vmatpush1.msra.mxu0 0.0
    %511 = vmatprep.subr.mxu0 0.0
    %512 = vmatpush1.msra.mxu0 0.0
    %513 = vmatprep.subr.mxu0 0.0
    %514 = vmatpush1.msra.mxu0 0.0
    %515 = vmatprep.mubr.f32.mxu0 0.0
    %516 = vmatmul.mubr.f32.gmra.mrb[0].mxu0 %v446
    %v517 = vpop.f32.mrb[0].mxu0
    %v518 = vadd.f32 %v443, %v517
    %v519 = vpop.f32.mrb[0].mxu0
    %520 = vmatprep.mubr.f32.mxu0 0.0
    %521 = vmatmul.mubr.f32.gmra.mrb[0].mxu0 %v449
    %v522 = vpop.f32.mrb[0].mxu0
    %v523 = vadd.f32 %v443, %v522
    %v524 = vpop.f32.mrb[0].mxu0
    %525 = vdwg.mxu0
    %v526 = vmax.f32 %v518, 0.0
    %v527 = vmax.f32 %v523, 0.0
    %v528 = vmul.f32 %v526, %v437
    %v529 = vmul.f32 %v527, %v438
    %v530 = vsub.f32 1.0, %v437
    %v531 = vsub.f32 1.0, %v438
    %v532 = vmul.f32 %v530, 0.0
    %v533 = vmul.f32 %v531, 0.0
    %v534 = vadd.f32 %v528, %v532
    %v535 = vadd.f32 %v529, %v533
    %v536 = vadd.f32 %v526, %v274
    %v537 = vadd.f32 %v527, %v275
    %v538 = vlaneseq
    %v539 = vshrl.u32 %v538, 7
    %v540 = vsub.s32 1, %v539
    %v541 = vrot.slane %v276, %v540
    %v542 = vadd.f32 %v536, %v541
    %v543 = vadd.f32 %v537, %v541
    %v544 = vmul.f32 %v542, %v375
    %v545 = vmul.f32 %v543, %v375
    %v546 = vsel %vm283, %v544, 0.0
    %547 = vadd.xlane.f32.xlu0 %v546
    %v548 = vpop.xlane.xlu0 %547
    %v549 = vsel %vm283, %v545, 0.0
    %550 = vadd.xlane.f32.xlu0 %v549
    %v551 = vpop.xlane.xlu0 %550
    %v552 = vadd.f32 %v548, %v385
    %v553 = vadd.f32 %v551, %v385
    %v554 = vxor.u32 %v552, 2147483648
    %v555 = vxor.u32 %v553, 2147483648
    %v556 = vmul.f32 %v554, 1.442695
    %v557 = vpow.pop %v556
    %v558 = vmul.f32 %v555, 1.442695
    %v559 = vpow.pop %v558
    %v560 = vadd.f32 %v557, 1.0
    %v561 = vadd.f32 %v559, 1.0
    %v562 = vrcp.pop %v560
    %v563 = vmul.f32 1.0, %v562
    %v564 = vrcp.pop %v561
    %v565 = vmul.f32 1.0, %v564
    %vm566 = vcmp.lt.f32.partialorder %v435, 1.0
    %vm567 = vcmp.lt.f32.partialorder %v436, 1.0
    %v568 = vsel %vm566, 1, 0
    %v569 = vsel %vm567, 1, 0
    %v570 = vcvt.s32.f32 %v568
    %v571 = vcvt.s32.f32 %v569
    %v572 = vmul.f32 %v563, %v570
    %v573 = vmul.f32 %v565, %v571
    %v574 = vadd.f32 %v435, %v572
    %v575 = vadd.f32 %v436, %v573
    %vm576 = vcmp.gt.f32.partialorder %v574, 0.9
    %vm577 = vcmp.gt.f32.partialorder %v575, 0.9
    %v578 = vsel %vm576, 1, 0
    %v579 = vsel %vm577, 1, 0
    %v580 = vcvt.s32.f32 %v578
    %v581 = vcvt.s32.f32 %v579
    %v582 = vmul.f32 %v580, %v570
    %v583 = vmul.f32 %v581, %v571
    %vm584 = vcmp.le.f32.partialorder %v574, 0.9
    %vm585 = vcmp.le.f32.partialorder %v575, 0.9
    %v586 = vsel %vm584, 1, 0
    %v587 = vsel %vm585, 1, 0
    %v588 = vcvt.s32.f32 %v586
    %v589 = vcvt.s32.f32 %v587
    %v590 = vmul.f32 %v588, %v570
    %v591 = vmul.f32 %v589, %v571
    %v592 = vmul.f32 %v563, %v590
    %v593 = vmul.f32 %v565, %v591
    %v594 = vadd.f32 %v435, %v592
    %v595 = vadd.f32 %v436, %v593
    %v596 = vsub.f32 1.0, %v594
    %v597 = vsub.f32 1.0, %v595
    %v598 = vmul.f32 %v582, %v596
    %v599 = vmul.f32 %v583, %v597
    %v600 = vadd.f32 %v431, %v598
    %v601 = vadd.f32 %v432, %v599
    %v602 = vmul.f32 %v582, %v600
    %v603 = vmul.f32 %v583, %v601
    %v604 = vadd.f32 %v594, %v602
    %v605 = vadd.f32 %v595, %v603
    %v606 = vadd.f32 %v592, %v602
    %v607 = vadd.f32 %v593, %v603
    %v609 = vsel %vm283, %v542, 0
    %v612 = vsel %vm283, %v543, 0
    %614 = vmatprep.subr.mxu0 0.0
    %615 = vmatpush1.msra.mxu0 %v278
    %616 = vmatprep.subr.mxu0 0.0
    %617 = vmatpush1.msra.mxu0 %v279
    %618 = vmatprep.subr.mxu0 0.0
    %619 = vmatpush1.msra.mxu0 %v280
    %620 = vmatprep.subr.mxu0 0.0
    %621 = vmatpush1.msra.mxu0 %v281
    %622 = vmatprep.subr.mxu0 0.0
    %623 = vmatpush1.msra.mxu0 0.0
    %624 = vmatprep.subr.mxu0 0.0
    %625 = vmatpush1.msra.mxu0 0.0
    %626 = vmatprep.subr.mxu0 0.0
    %627 = vmatpush1.msra.mxu0 0.0
    %628 = vmatprep.subr.mxu0 0.0
    %629 = vmatpush1.msra.mxu0 0.0
    %630 = vmatprep.subr.mxu0 0.0
    %631 = vmatpush1.msra.mxu0 0.0
    %632 = vmatprep.subr.mxu0 0.0
    %633 = vmatpush1.msra.mxu0 0.0
    %634 = vmatprep.subr.mxu0 0.0
    %635 = vmatpush1.msra.mxu0 0.0
    %636 = vmatprep.subr.mxu0 0.0
    %637 = vmatpush1.msra.mxu0 0.0
    %638 = vmatprep.subr.mxu0 0.0
    %639 = vmatpush1.msra.mxu0 0.0
    %640 = vmatprep.subr.mxu0 0.0
    %641 = vmatpush1.msra.mxu0 0.0
    %642 = vmatprep.subr.mxu0 0.0
    %643 = vmatpush1.msra.mxu0 0.0
    %644 = vmatprep.subr.mxu0 0.0
    %645 = vmatpush1.msra.mxu0 0.0
    %646 = vmatprep.subr.mxu0 0.0
    %647 = vmatpush1.msra.mxu0 0.0
    %648 = vmatprep.subr.mxu0 0.0
    %649 = vmatpush1.msra.mxu0 0.0
    %650 = vmatprep.subr.mxu0 0.0
    %651 = vmatpush1.msra.mxu0 0.0
    %652 = vmatprep.subr.mxu0 0.0
    %653 = vmatpush1.msra.mxu0 0.0
    %654 = vmatprep.subr.mxu0 0.0
    %655 = vmatpush1.msra.mxu0 0.0
    %656 = vmatprep.subr.mxu0 0.0
    %657 = vmatpush1.msra.mxu0 0.0
    %658 = vmatprep.subr.mxu0 0.0
    %659 = vmatpush1.msra.mxu0 0.0
    %660 = vmatprep.subr.mxu0 0.0
    %661 = vmatpush1.msra.mxu0 0.0
    %662 = vmatprep.subr.mxu0 0.0
    %663 = vmatpush1.msra.mxu0 0.0
    %664 = vmatprep.subr.mxu0 0.0
    %665 = vmatpush1.msra.mxu0 0.0
    %666 = vmatprep.subr.mxu0 0.0
    %667 = vmatpush1.msra.mxu0 0.0
    %668 = vmatprep.subr.mxu0 0.0
    %669 = vmatpush1.msra.mxu0 0.0
    %670 = vmatprep.subr.mxu0 0.0
    %671 = vmatpush1.msra.mxu0 0.0
    %672 = vmatprep.subr.mxu0 0.0
    %673 = vmatpush1.msra.mxu0 0.0
    %674 = vmatprep.subr.mxu0 0.0
    %675 = vmatpush1.msra.mxu0 0.0
    %676 = vmatprep.subr.mxu0 0.0
    %677 = vmatpush1.msra.mxu0 0.0
    %678 = vmatprep.mubr.f32.mxu0 0.0
    %679 = vmatmul.mubr.f32.gmra.mrb[0].mxu0 %v609
    %v680 = vpop.f32.mrb[0].mxu0
    %v681 = vadd.f32 %v443, %v680
    %v682 = vpop.f32.mrb[0].mxu0
    %683 = vmatprep.mubr.f32.mxu0 0.0
    %684 = vmatmul.mubr.f32.gmra.mrb[0].mxu0 %v612
    %v685 = vpop.f32.mrb[0].mxu0
    %v686 = vadd.f32 %v443, %v685
    %v687 = vpop.f32.mrb[0].mxu0
    %688 = vdwg.mxu0
    %v689 = vmax.f32 %v681, 0.0
    %v690 = vmax.f32 %v686, 0.0
    %v691 = vmul.f32 %v689, %v606
    %v692 = vmul.f32 %v690, %v607
    %v693 = vsub.f32 1.0, %v606
    %v694 = vsub.f32 1.0, %v607
    %v695 = vmul.f32 %v534, %v693
    %v696 = vmul.f32 %v535, %v694
    %v697 = vadd.f32 %v691, %v695
    %v698 = vadd.f32 %v692, %v696
    %v699 = vadd.f32 %v689, %v274
    %v700 = vadd.f32 %v690, %v275
    %v701 = vlaneseq
    %v702 = vshrl.u32 %v701, 7
    %v703 = vsub.s32 2, %v702
    %v704 = vrot.slane %v276, %v703
    %v705 = vadd.f32 %v699, %v704
    %v706 = vadd.f32 %v700, %v704
    %v707 = vmul.f32 %v705, %v375
    %v708 = vmul.f32 %v706, %v375
    %v709 = vsel %vm283, %v707, 0.0
    %710 = vadd.xlane.f32.xlu0 %v709
    %v711 = vpop.xlane.xlu0 %710
    %v712 = vsel %vm283, %v708, 0.0
    %713 = vadd.xlane.f32.xlu0 %v712
    %v714 = vpop.xlane.xlu0 %713
    %v715 = vadd.f32 %v711, %v385
    %v716 = vadd.f32 %v714, %v385
    %v717 = vxor.u32 %v715, 2147483648
    %v718 = vxor.u32 %v716, 2147483648
    %v719 = vmul.f32 %v717, 1.442695
    %v720 = vpow.pop %v719
    %v721 = vmul.f32 %v718, 1.442695
    %v722 = vpow.pop %v721
    %v723 = vadd.f32 %v720, 1.0
    %v724 = vadd.f32 %v722, 1.0
    %v725 = vrcp.pop %v723
    %v726 = vmul.f32 1.0, %v725
    %v727 = vrcp.pop %v724
    %v728 = vmul.f32 1.0, %v727
    %vm729 = vcmp.lt.f32.partialorder %v604, 1.0
    %vm730 = vcmp.lt.f32.partialorder %v605, 1.0
    %v731 = vsel %vm729, 1, 0
    %v732 = vsel %vm730, 1, 0
    %v733 = vcvt.s32.f32 %v731
    %v734 = vcvt.s32.f32 %v732
    %v735 = vmul.f32 %v726, %v733
    %v736 = vmul.f32 %v728, %v734
    %v737 = vadd.f32 %v604, %v735
    %v738 = vadd.f32 %v605, %v736
    %vm739 = vcmp.gt.f32.partialorder %v737, 0.9
    %vm740 = vcmp.gt.f32.partialorder %v738, 0.9
    %v741 = vsel %vm739, 1, 0
    %v742 = vsel %vm740, 1, 0
    %v743 = vcvt.s32.f32 %v741
    %v744 = vcvt.s32.f32 %v742
    %v745 = vmul.f32 %v743, %v733
    %v746 = vmul.f32 %v744, %v734
    %vm747 = vcmp.le.f32.partialorder %v737, 0.9
    %vm748 = vcmp.le.f32.partialorder %v738, 0.9
    %v749 = vsel %vm747, 1, 0
    %v750 = vsel %vm748, 1, 0
    %v751 = vcvt.s32.f32 %v749
    %v752 = vcvt.s32.f32 %v750
    %v753 = vmul.f32 %v751, %v733
    %v754 = vmul.f32 %v752, %v734
    %v755 = vmul.f32 %v726, %v753
    %v756 = vmul.f32 %v728, %v754
    %v757 = vadd.f32 %v604, %v755
    %v758 = vadd.f32 %v605, %v756
    %v759 = vsub.f32 1.0, %v757
    %v760 = vsub.f32 1.0, %v758
    %v761 = vmul.f32 %v745, %v759
    %v762 = vmul.f32 %v746, %v760
    %v763 = vadd.f32 %v600, %v761
    %v764 = vadd.f32 %v601, %v762
    %v765 = vmul.f32 %v745, %v763
    %v766 = vmul.f32 %v746, %v764
    %v767 = vadd.f32 %v755, %v765
    %v768 = vadd.f32 %v756, %v766
    %v770 = vsel %vm283, %v705, 0
    %v773 = vsel %vm283, %v706, 0
    %775 = vmatprep.subr.mxu0 0.0
    %776 = vmatpush1.msra.mxu0 %v278
    %777 = vmatprep.subr.mxu0 0.0
    %778 = vmatpush1.msra.mxu0 %v279
    %779 = vmatprep.subr.mxu0 0.0
    %780 = vmatpush1.msra.mxu0 %v280
    %781 = vmatprep.subr.mxu0 0.0
    %782 = vmatpush1.msra.mxu0 %v281
    %783 = vmatprep.subr.mxu0 0.0
    %784 = vmatpush1.msra.mxu0 0.0
    %785 = vmatprep.subr.mxu0 0.0
    %786 = vmatpush1.msra.mxu0 0.0
    %787 = vmatprep.subr.mxu0 0.0
    %788 = vmatpush1.msra.mxu0 0.0
    %789 = vmatprep.subr.mxu0 0.0
    %790 = vmatpush1.msra.mxu0 0.0
    %791 = vmatprep.subr.mxu0 0.0
    %792 = vmatpush1.msra.mxu0 0.0
    %793 = vmatprep.subr.mxu0 0.0
    %794 = vmatpush1.msra.mxu0 0.0
    %795 = vmatprep.subr.mxu0 0.0
    %796 = vmatpush1.msra.mxu0 0.0
    %797 = vmatprep.subr.mxu0 0.0
    %798 = vmatpush1.msra.mxu0 0.0
    %799 = vmatprep.subr.mxu0 0.0
    %800 = vmatpush1.msra.mxu0 0.0
    %801 = vmatprep.subr.mxu0 0.0
    %802 = vmatpush1.msra.mxu0 0.0
    %803 = vmatprep.subr.mxu0 0.0
    %804 = vmatpush1.msra.mxu0 0.0
    %805 = vmatprep.subr.mxu0 0.0
    %806 = vmatpush1.msra.mxu0 0.0
    %807 = vmatprep.subr.mxu0 0.0
    %808 = vmatpush1.msra.mxu0 0.0
    %809 = vmatprep.subr.mxu0 0.0
    %810 = vmatpush1.msra.mxu0 0.0
    %811 = vmatprep.subr.mxu0 0.0
    %812 = vmatpush1.msra.mxu0 0.0
    %813 = vmatprep.subr.mxu0 0.0
    %814 = vmatpush1.msra.mxu0 0.0
    %815 = vmatprep.subr.mxu0 0.0
    %816 = vmatpush1.msra.mxu0 0.0
    %817 = vmatprep.subr.mxu0 0.0
    %818 = vmatpush1.msra.mxu0 0.0
    %819 = vmatprep.subr.mxu0 0.0
    %820 = vmatpush1.msra.mxu0 0.0
    %821 = vmatprep.subr.mxu0 0.0
    %822 = vmatpush1.msra.mxu0 0.0
    %823 = vmatprep.subr.mxu0 0.0
    %824 = vmatpush1.msra.mxu0 0.0
    %825 = vmatprep.subr.mxu0 0.0
    %826 = vmatpush1.msra.mxu0 0.0
    %827 = vmatprep.subr.mxu0 0.0
    %828 = vmatpush1.msra.mxu0 0.0
    %829 = vmatprep.subr.mxu0 0.0
    %830 = vmatpush1.msra.mxu0 0.0
    %831 = vmatprep.subr.mxu0 0.0
    %832 = vmatpush1.msra.mxu0 0.0
    %833 = vmatprep.subr.mxu0 0.0
    %834 = vmatpush1.msra.mxu0 0.0
    %835 = vmatprep.subr.mxu0 0.0
    %836 = vmatpush1.msra.mxu0 0.0
    %837 = vmatprep.subr.mxu0 0.0
    %838 = vmatpush1.msra.mxu0 0.0
    %839 = vmatprep.mubr.f32.mxu0 0.0
    %840 = vmatmul.mubr.f32.gmra.mrb[0].mxu0 %v770
    %v841 = vpop.f32.mrb[0].mxu0
    %v842 = vadd.f32 %v443, %v841
    %v843 = vpop.f32.mrb[0].mxu0
    %844 = vmatprep.mubr.f32.mxu0 0.0
    %845 = vmatmul.mubr.f32.gmra.mrb[0].mxu0 %v773
    %v846 = vpop.f32.mrb[0].mxu0
    %v847 = vadd.f32 %v443, %v846
    %v848 = vpop.f32.mrb[0].mxu0
    %849 = vdwg.mxu0
    %v850 = vmax.f32 %v842, 0.0
    %v851 = vmax.f32 %v847, 0.0
    %v852 = vmul.f32 %v850, %v767
    %v853 = vmul.f32 %v851, %v768
    %v854 = vsub.f32 1.0, %v767
    %v855 = vsub.f32 1.0, %v768
    %v856 = vmul.f32 %v697, %v854
    %v857 = vmul.f32 %v698, %v855
    %v858 = vadd.f32 %v852, %v856
    %v859 = vadd.f32 %v853, %v857
    %v860 = vsel %vm283, %v858, 0.0
    %861 = vadd.xlane.f32.xlu0 %v860
    %v862 = vpop.xlane.xlu0 %861
    %v863 = vsel %vm283, %v859, 0.0
    %864 = vadd.xlane.f32.xlu0 %v863
    %v865 = vpop.xlane.xlu0 %864
    %v866 = vrcp.pop 32.0
    %v867 = vmul.f32 %v862, %v866
    %v868 = vmul.f32 %v865, %v866
    %v869 = vsub.f32 %v858, %v867
    %v870 = vsub.f32 %v859, %v868
    %v871 = vmul.f32 %v869, %v869
    %v872 = vmul.f32 %v870, %v870
    %v873 = vsel %vm283, %v871, 0.0
    %874 = vadd.xlane.f32.xlu0 %v873
    %v875 = vpop.xlane.xlu0 %874
    %v876 = vsel %vm283, %v872, 0.0
    %877 = vadd.xlane.f32.xlu0 %v876
    %v878 = vpop.xlane.xlu0 %877
    %v879 = vmul.f32 %v875, %v866
    %v880 = vmul.f32 %v878, %v866
    %v881 = vadd.f32 %v879, 1e-06
    %v882 = vadd.f32 %v880, 1e-06
    %v883 = vrsqrt.pop %v881
    %v884 = vrsqrt.pop %v882
    %v885 = vmul.f32 %v869, %v883
    %v886 = vmul.f32 %v870, %v884
    %v887 = vld [vmem:[#allocation16] sm:$0x1]
    %v889 = vlaneseq
    %v890 = vshrl.u32 %v889, 7
    %v891 = vsub.s32 0, %v890
    %v892 = vrot.slane %v887, %v891
    %v894 = vmul.f32 %v885, %v892
    %v895 = vmul.f32 %v886, %v892
    %v896 = vld [vmem:[#allocation18] sm:$0x1]
    %v898 = vlaneseq
    %v899 = vshrl.u32 %v898, 7
    %v900 = vsub.s32 0, %v899
    %v901 = vrot.slane %v896, %v900
    %v903 = vadd.f32 %v894, %v901
    %v904 = vadd.f32 %v895, %v901
    %v905 = vld [vmem:[#allocation19] sm:$0x3]
    %s906 = sld [smem:[#allocation3]]
    %v907 = vld [vmem:[#allocation21] sm:$0xff]
    %v908 = vld [vmem:[#allocation21 + $0x8] sm:$0xff]
    %v909 = vld [vmem:[%s11] sm:$0xff]
    %v910 = vld [vmem:[%s11 + $0x8] sm:$0xff]
    %v911 = vld [vmem:[%s11 + $0x10] sm:$0xff]
    %v912 = vld [vmem:[%s11 + $0x18] sm:$0xff]
    %v913 = vld [vmem:[#allocation22] sm:$0xff]
    %v914 = vld [vmem:[#allocation22 + $0x8] sm:$0xff]
    %v915 = vld [vmem:[#allocation24] sm:$0x7]
    %v916 = vld [vmem:[#allocation25] sm:$0x1]
    %v917 = vld [vmem:[%s15] sm:$0xff]
    %v918 = vld [vmem:[%s15 + $0x8] sm:$0xff]
    %v919 = vld [vmem:[%s15 + $0x10] sm:$0xff]
    %v920 = vld [vmem:[%s15 + $0x18] sm:$0xff]
    %v921 = vld [vmem:[%s16] sm:$0x1]
    %v923 = vsel %vm283, %v907, 0
    %v926 = vsel %vm283, %v908, 0
    %928 = vmatprep.subr.mxu0 0.0
    %929 = vmatpush1.msra.mxu0 %v909
    %930 = vmatprep.subr.mxu0 0.0
    %931 = vmatpush1.msra.mxu0 %v910
    %932 = vmatprep.subr.mxu0 0.0
    %933 = vmatpush1.msra.mxu0 %v911
    %934 = vmatprep.subr.mxu0 0.0
    %935 = vmatpush1.msra.mxu0 %v912
    %936 = vmatprep.subr.mxu0 0.0
    %937 = vmatpush1.msra.mxu0 0.0
    %938 = vmatprep.subr.mxu0 0.0
    %939 = vmatpush1.msra.mxu0 0.0
    %940 = vmatprep.subr.mxu0 0.0
    %941 = vmatpush1.msra.mxu0 0.0
    %942 = vmatprep.subr.mxu0 0.0
    %943 = vmatpush1.msra.mxu0 0.0
    %944 = vmatprep.subr.mxu0 0.0
    %945 = vmatpush1.msra.mxu0 0.0
    %946 = vmatprep.subr.mxu0 0.0
    %947 = vmatpush1.msra.mxu0 0.0
    %948 = vmatprep.subr.mxu0 0.0
    %949 = vmatpush1.msra.mxu0 0.0
    %950 = vmatprep.subr.mxu0 0.0
    %951 = vmatpush1.msra.mxu0 0.0
    %952 = vmatprep.subr.mxu0 0.0
    %953 = vmatpush1.msra.mxu0 0.0
    %954 = vmatprep.subr.mxu0 0.0
    %955 = vmatpush1.msra.mxu0 0.0
    %956 = vmatprep.subr.mxu0 0.0
    %957 = vmatpush1.msra.mxu0 0.0
    %958 = vmatprep.subr.mxu0 0.0
    %959 = vmatpush1.msra.mxu0 0.0
    %960 = vmatprep.subr.mxu0 0.0
    %961 = vmatpush1.msra.mxu0 0.0
    %962 = vmatprep.subr.mxu0 0.0
    %963 = vmatpush1.msra.mxu0 0.0
    %964 = vmatprep.subr.mxu0 0.0
    %965 = vmatpush1.msra.mxu0 0.0
    %966 = vmatprep.subr.mxu0 0.0
    %967 = vmatpush1.msra.mxu0 0.0
    %968 = vmatprep.subr.mxu0 0.0
    %969 = vmatpush1.msra.mxu0 0.0
    %970 = vmatprep.subr.mxu0 0.0
    %971 = vmatpush1.msra.mxu0 0.0
    %972 = vmatprep.subr.mxu0 0.0
    %973 = vmatpush1.msra.mxu0 0.0
    %974 = vmatprep.subr.mxu0 0.0
    %975 = vmatpush1.msra.mxu0 0.0
    %976 = vmatprep.subr.mxu0 0.0
    %977 = vmatpush1.msra.mxu0 0.0
    %978 = vmatprep.subr.mxu0 0.0
    %979 = vmatpush1.msra.mxu0 0.0
    %980 = vmatprep.subr.mxu0 0.0
    %981 = vmatpush1.msra.mxu0 0.0
    %982 = vmatprep.subr.mxu0 0.0
    %983 = vmatpush1.msra.mxu0 0.0
    %984 = vmatprep.subr.mxu0 0.0
    %985 = vmatpush1.msra.mxu0 0.0
    %986 = vmatprep.subr.mxu0 0.0
    %987 = vmatpush1.msra.mxu0 0.0
    %988 = vmatprep.subr.mxu0 0.0
    %989 = vmatpush1.msra.mxu0 0.0
    %990 = vmatprep.subr.mxu0 0.0
    %991 = vmatpush1.msra.mxu0 0.0
    %992 = vmatprep.mubr.f32.mxu0 0.0
    %993 = vmatmul.mubr.f32.gmra.mrb[0].mxu0 %v923
    %v994 = vpop.f32.mrb[0].mxu0
    %v995 = vadd.f32 %v913, %v994
    %v996 = vpop.f32.mrb[0].mxu0
    %997 = vmatprep.mubr.f32.mxu0 0.0
    %998 = vmatmul.mubr.f32.gmra.mrb[0].mxu0 %v926
    %v999 = vpop.f32.mrb[0].mxu0
    %v1000 = vadd.f32 %v914, %v999
    %v1001 = vpop.f32.mrb[0].mxu0
    %1002 = vdwg.mxu0
    %v1003 = vlaneseq
    %v1004 = vshrl.u32 %v1003, 7
    %v1005 = vsub.s32 0, %v1004
    %v1006 = vrot.slane %v915, %v1005
    %v1007 = vadd.f32 %v995, %v1006
    %v1008 = vadd.f32 %v1000, %v1006
    %v1010 = vlaneseq
    %v1011 = vshrl.u32 %v1010, 7
    %v1012 = vsub.s32 0, %v1011
    %v1013 = vrot.slane %v916, %v1012
    %v1015 = vmul.f32 %v1007, %v1013
    %v1016 = vmul.f32 %v1008, %v1013
    %v1017 = vsel %vm283, %v1015, 0.0
    %1018 = vadd.xlane.f32.xlu0 %v1017
    %v1019 = vpop.xlane.xlu0 %1018
    %v1020 = vsel %vm283, %v1016, 0.0
    %1021 = vadd.xlane.f32.xlu0 %v1020
    %v1022 = vpop.xlane.xlu0 %1021
    %v1023 = vstv %s906
    %v1024 = vadd.f32 %v1019, %v1023
    %v1025 = vadd.f32 %v1022, %v1023
    %v1026 = vxor.u32 %v1024, 2147483648
    %v1027 = vxor.u32 %v1025, 2147483648
    %v1028 = vmul.f32 %v1026, 1.442695
    %v1029 = vpow.pop %v1028
    %v1030 = vmul.f32 %v1027, 1.442695
    %v1031 = vpow.pop %v1030
    %v1032 = vadd.f32 %v1029, 1.0
    %v1033 = vadd.f32 %v1031, 1.0
    %v1034 = vrcp.pop %v1032
    %v1035 = vmul.f32 1.0, %v1034
    %v1036 = vrcp.pop %v1033
    %v1037 = vmul.f32 1.0, %v1036
    %v1038 = vmul.f32 %v1035, %v402
    %v1039 = vmul.f32 %v1037, %v402
    %v1040 = vadd.f32 %v1038, 0.0
    %v1041 = vadd.f32 %v1039, 0.0
    %vm1042 = vcmp.gt.f32.partialorder %v1040, 0.9
    %vm1043 = vcmp.gt.f32.partialorder %v1041, 0.9
    %v1044 = vsel %vm1042, 1, 0
    %v1045 = vsel %vm1043, 1, 0
    %v1046 = vcvt.s32.f32 %v1044
    %v1047 = vcvt.s32.f32 %v1045
    %v1048 = vmul.f32 %v1046, %v402
    %v1049 = vmul.f32 %v1047, %v402
    %vm1050 = vcmp.le.f32.partialorder %v1040, 0.9
    %vm1051 = vcmp.le.f32.partialorder %v1041, 0.9
    %v1052 = vsel %vm1050, 1, 0
    %v1053 = vsel %vm1051, 1, 0
    %v1054 = vcvt.s32.f32 %v1052
    %v1055 = vcvt.s32.f32 %v1053
    %v1056 = vmul.f32 %v1054, %v402
    %v1057 = vmul.f32 %v1055, %v402
    %v1058 = vmul.f32 %v1035, %v1056
    %v1059 = vmul.f32 %v1037, %v1057
    %v1060 = vadd.f32 %v1058, 0.0
    %v1061 = vadd.f32 %v1059, 0.0
    %v1062 = vsub.f32 1.0, %v1060
    %v1063 = vsub.f32 1.0, %v1061
    %v1064 = vmul.f32 %v1048, %v1062
    %v1065 = vmul.f32 %v1049, %v1063
    %v1066 = vadd.f32 %v1064, 0.0
    %v1067 = vadd.f32 %v1065, 0.0
    %v1068 = vmul.f32 %v1048, %v1066
    %v1069 = vmul.f32 %v1049, %v1067
    %v1070 = vadd.f32 %v1060, %v1068
    %v1071 = vadd.f32 %v1061, %v1069
    %v1072 = vadd.f32 %v1058, %v1068
    %v1073 = vadd.f32 %v1059, %v1069
    %v1075 = vlaneseq
    %v1076 = vshrl.u32 %v1075, 7
    %v1077 = vsub.s32 0, %v1076
    %v1078 = vrot.slane %v921, %v1077
    %v1081 = vsel %vm283, %v1007, 0
    %v1084 = vsel %vm283, %v1008, 0
    %1086 = vmatprep.subr.mxu0 0.0
    %1087 = vmatpush1.msra.mxu0 %v917
    %1088 = vmatprep.subr.mxu0 0.0
    %1089 = vmatpush1.msra.mxu0 %v918
    %1090 = vmatprep.subr.mxu0 0.0
    %1091 = vmatpush1.msra.mxu0 %v919
    %1092 = vmatprep.subr.mxu0 0.0
    %1093 = vmatpush1.msra.mxu0 %v920
    %1094 = vmatprep.subr.mxu0 0.0
    %1095 = vmatpush1.msra.mxu0 0.0
    %1096 = vmatprep.subr.mxu0 0.0
    %1097 = vmatpush1.msra.mxu0 0.0
    %1098 = vmatprep.subr.mxu0 0.0
    %1099 = vmatpush1.msra.mxu0 0.0
    %1100 = vmatprep.subr.mxu0 0.0
    %1101 = vmatpush1.msra.mxu0 0.0
    %1102 = vmatprep.subr.mxu0 0.0
    %1103 = vmatpush1.msra.mxu0 0.0
    %1104 = vmatprep.subr.mxu0 0.0
    %1105 = vmatpush1.msra.mxu0 0.0
    %1106 = vmatprep.subr.mxu0 0.0
    %1107 = vmatpush1.msra.mxu0 0.0
    %1108 = vmatprep.subr.mxu0 0.0
    %1109 = vmatpush1.msra.mxu0 0.0
    %1110 = vmatprep.subr.mxu0 0.0
    %1111 = vmatpush1.msra.mxu0 0.0
    %1112 = vmatprep.subr.mxu0 0.0
    %1113 = vmatpush1.msra.mxu0 0.0
    %1114 = vmatprep.subr.mxu0 0.0
    %1115 = vmatpush1.msra.mxu0 0.0
    %1116 = vmatprep.subr.mxu0 0.0
    %1117 = vmatpush1.msra.mxu0 0.0
    %1118 = vmatprep.subr.mxu0 0.0
    %1119 = vmatpush1.msra.mxu0 0.0
    %1120 = vmatprep.subr.mxu0 0.0
    %1121 = vmatpush1.msra.mxu0 0.0
    %1122 = vmatprep.subr.mxu0 0.0
    %1123 = vmatpush1.msra.mxu0 0.0
    %1124 = vmatprep.subr.mxu0 0.0
    %1125 = vmatpush1.msra.mxu0 0.0
    %1126 = vmatprep.subr.mxu0 0.0
    %1127 = vmatpush1.msra.mxu0 0.0
    %1128 = vmatprep.subr.mxu0 0.0
    %1129 = vmatpush1.msra.mxu0 0.0
    %1130 = vmatprep.subr.mxu0 0.0
    %1131 = vmatpush1.msra.mxu0 0.0
    %1132 = vmatprep.subr.mxu0 0.0
    %1133 = vmatpush1.msra.mxu0 0.0
    %1134 = vmatprep.subr.mxu0 0.0
    %1135 = vmatpush1.msra.mxu0 0.0
    %1136 = vmatprep.subr.mxu0 0.0
    %1137 = vmatpush1.msra.mxu0 0.0
    %1138 = vmatprep.subr.mxu0 0.0
    %1139 = vmatpush1.msra.mxu0 0.0
    %1140 = vmatprep.subr.mxu0 0.0
    %1141 = vmatpush1.msra.mxu0 0.0
    %1142 = vmatprep.subr.mxu0 0.0
    %1143 = vmatpush1.msra.mxu0 0.0
    %1144 = vmatprep.subr.mxu0 0.0
    %1145 = vmatpush1.msra.mxu0 0.0
    %1146 = vmatprep.subr.mxu0 0.0
    %1147 = vmatpush1.msra.mxu0 0.0
    %1148 = vmatprep.subr.mxu0 0.0
    %1149 = vmatpush1.msra.mxu0 0.0
    %1150 = vmatprep.mubr.f32.mxu0 0.0
    %1151 = vmatmul.mubr.f32.gmra.mrb[0].mxu0 %v1081
    %v1152 = vpop.f32.mrb[0].mxu0
    %v1153 = vadd.f32 %v1078, %v1152
    %v1154 = vpop.f32.mrb[0].mxu0
    %1155 = vmatprep.mubr.f32.mxu0 0.0
    %1156 = vmatmul.mubr.f32.gmra.mrb[0].mxu0 %v1084
    %v1157 = vpop.f32.mrb[0].mxu0
    %v1158 = vadd.f32 %v1078, %v1157
    %v1159 = vpop.f32.mrb[0].mxu0
    %1160 = vdwg.mxu0
    %v1161 = vmax.f32 %v1153, 0.0
    %v1162 = vmax.f32 %v1158, 0.0
    %v1163 = vmul.f32 %v1161, %v1072
    %v1164 = vmul.f32 %v1162, %v1073
    %v1165 = vsub.f32 1.0, %v1072
    %v1166 = vsub.f32 1.0, %v1073
    %v1167 = vmul.f32 %v1165, 0.0
    %v1168 = vmul.f32 %v1166, 0.0
    %v1169 = vadd.f32 %v1163, %v1167
    %v1170 = vadd.f32 %v1164, %v1168
    %v1171 = vadd.f32 %v1161, %v913
    %v1172 = vadd.f32 %v1162, %v914
    %v1173 = vlaneseq
    %v1174 = vshrl.u32 %v1173, 7
    %v1175 = vsub.s32 1, %v1174
    %v1176 = vrot.slane %v915, %v1175
    %v1177 = vadd.f32 %v1171, %v1176
    %v1178 = vadd.f32 %v1172, %v1176
    %v1179 = vmul.f32 %v1177, %v1013
    %v1180 = vmul.f32 %v1178, %v1013
    %v1181 = vsel %vm283, %v1179, 0.0
    %1182 = vadd.xlane.f32.xlu0 %v1181
    %v1183 = vpop.xlane.xlu0 %1182
    %v1184 = vsel %vm283, %v1180, 0.0
    %1185 = vadd.xlane.f32.xlu0 %v1184
    %v1186 = vpop.xlane.xlu0 %1185
    %v1187 = vadd.f32 %v1183, %v1023
    %v1188 = vadd.f32 %v1186, %v1023
    %v1189 = vxor.u32 %v1187, 2147483648
    %v1190 = vxor.u32 %v1188, 2147483648
    %v1191 = vmul.f32 %v1189, 1.442695
    %v1192 = vpow.pop %v1191
    %v1193 = vmul.f32 %v1190, 1.442695
    %v1194 = vpow.pop %v1193
    %v1195 = vadd.f32 %v1192, 1.0
    %v1196 = vadd.f32 %v1194, 1.0
    %v1197 = vrcp.pop %v1195
    %v1198 = vmul.f32 1.0, %v1197
    %v1199 = vrcp.pop %v1196
    %v1200 = vmul.f32 1.0, %v1199
    %vm1201 = vcmp.lt.f32.partialorder %v1070, 1.0
    %vm1202 = vcmp.lt.f32.partialorder %v1071, 1.0
    %v1203 = vsel %vm1201, 1, 0
    %v1204 = vsel %vm1202, 1, 0
    %v1205 = vcvt.s32.f32 %v1203
    %v1206 = vcvt.s32.f32 %v1204
    %v1207 = vmul.f32 %v1198, %v1205
    %v1208 = vmul.f32 %v1200, %v1206
    %v1209 = vadd.f32 %v1070, %v1207
    %v1210 = vadd.f32 %v1071, %v1208
    %vm1211 = vcmp.gt.f32.partialorder %v1209, 0.9
    %vm1212 = vcmp.gt.f32.partialorder %v1210, 0.9
    %v1213 = vsel %vm1211, 1, 0
    %v1214 = vsel %vm1212, 1, 0
    %v1215 = vcvt.s32.f32 %v1213
    %v1216 = vcvt.s32.f32 %v1214
    %v1217 = vmul.f32 %v1215, %v1205
    %v1218 = vmul.f32 %v1216, %v1206
    %vm1219 = vcmp.le.f32.partialorder %v1209, 0.9
    %vm1220 = vcmp.le.f32.partialorder %v1210, 0.9
    %v1221 = vsel %vm1219, 1, 0
    %v1222 = vsel %vm1220, 1, 0
    %v1223 = vcvt.s32.f32 %v1221
    %v1224 = vcvt.s32.f32 %v1222
    %v1225 = vmul.f32 %v1223, %v1205
    %v1226 = vmul.f32 %v1224, %v1206
    %v1227 = vmul.f32 %v1198, %v1225
    %v1228 = vmul.f32 %v1200, %v1226
    %v1229 = vadd.f32 %v1070, %v1227
    %v1230 = vadd.f32 %v1071, %v1228
    %v1231 = vsub.f32 1.0, %v1229
    %v1232 = vsub.f32 1.0, %v1230
    %v1233 = vmul.f32 %v1217, %v1231
    %v1234 = vmul.f32 %v1218, %v1232
    %v1235 = vadd.f32 %v1066, %v1233
    %v1236 = vadd.f32 %v1067, %v1234
    %v1237 = vmul.f32 %v1217, %v1235
    %v1238 = vmul.f32 %v1218, %v1236
    %v1239 = vadd.f32 %v1229, %v1237
    %v1240 = vadd.f32 %v1230, %v1238
    %v1241 = vadd.f32 %v1227, %v1237
    %v1242 = vadd.f32 %v1228, %v1238
    %v1244 = vsel %vm283, %v1177, 0
    %v1247 = vsel %vm283, %v1178, 0
    %1249 = vmatprep.subr.mxu0 0.0
    %1250 = vmatpush1.msra.mxu0 %v917
    %1251 = vmatprep.subr.mxu0 0.0
    %1252 = vmatpush1.msra.mxu0 %v918
    %1253 = vmatprep.subr.mxu0 0.0
    %1254 = vmatpush1.msra.mxu0 %v919
    %1255 = vmatprep.subr.mxu0 0.0
    %1256 = vmatpush1.msra.mxu0 %v920
    %1257 = vmatprep.subr.mxu0 0.0
    %1258 = vmatpush1.msra.mxu0 0.0
    %1259 = vmatprep.subr.mxu0 0.0
    %1260 = vmatpush1.msra.mxu0 0.0
    %1261 = vmatprep.subr.mxu0 0.0
    %1262 = vmatpush1.msra.mxu0 0.0
    %1263 = vmatprep.subr.mxu0 0.0
    %1264 = vmatpush1.msra.mxu0 0.0
    %1265 = vmatprep.subr.mxu0 0.0
    %1266 = vmatpush1.msra.mxu0 0.0
    %1267 = vmatprep.subr.mxu0 0.0
    %1268 = vmatpush1.msra.mxu0 0.0
    %1269 = vmatprep.subr.mxu0 0.0
    %1270 = vmatpush1.msra.mxu0 0.0
    %1271 = vmatprep.subr.mxu0 0.0
    %1272 = vmatpush1.msra.mxu0 0.0
    %1273 = vmatprep.subr.mxu0 0.0
    %1274 = vmatpush1.msra.mxu0 0.0
    %1275 = vmatprep.subr.mxu0 0.0
    %1276 = vmatpush1.msra.mxu0 0.0
    %1277 = vmatprep.subr.mxu0 0.0
    %1278 = vmatpush1.msra.mxu0 0.0
    %1279 = vmatprep.subr.mxu0 0.0
    %1280 = vmatpush1.msra.mxu0 0.0
    %1281 = vmatprep.subr.mxu0 0.0
    %1282 = vmatpush1.msra.mxu0 0.0
    %1283 = vmatprep.subr.mxu0 0.0
    %1284 = vmatpush1.msra.mxu0 0.0
    %1285 = vmatprep.subr.mxu0 0.0
    %1286 = vmatpush1.msra.mxu0 0.0
    %1287 = vmatprep.subr.mxu0 0.0
    %1288 = vmatpush1.msra.mxu0 0.0
    %1289 = vmatprep.subr.mxu0 0.0
    %1290 = vmatpush1.msra.mxu0 0.0
    %1291 = vmatprep.subr.mxu0 0.0
    %1292 = vmatpush1.msra.mxu0 0.0
    %1293 = vmatprep.subr.mxu0 0.0
    %1294 = vmatpush1.msra.mxu0 0.0
    %1295 = vmatprep.subr.mxu0 0.0
    %1296 = vmatpush1.msra.mxu0 0.0
    %1297 = vmatprep.subr.mxu0 0.0
    %1298 = vmatpush1.msra.mxu0 0.0
    %1299 = vmatprep.subr.mxu0 0.0
    %1300 = vmatpush1.msra.mxu0 0.0
    %1301 = vmatprep.subr.mxu0 0.0
    %1302 = vmatpush1.msra.mxu0 0.0
    %1303 = vmatprep.subr.mxu0 0.0
    %1304 = vmatpush1.msra.mxu0 0.0
    %1305 = vmatprep.subr.mxu0 0.0
    %1306 = vmatpush1.msra.mxu0 0.0
    %1307 = vmatprep.subr.mxu0 0.0
    %1308 = vmatpush1.msra.mxu0 0.0
    %1309 = vmatprep.subr.mxu0 0.0
    %1310 = vmatpush1.msra.mxu0 0.0
    %1311 = vmatprep.subr.mxu0 0.0
    %1312 = vmatpush1.msra.mxu0 0.0
    %1313 = vmatprep.mubr.f32.mxu0 0.0
    %1314 = vmatmul.mubr.f32.gmra.mrb[0].mxu0 %v1244
    %v1315 = vpop.f32.mrb[0].mxu0
    %v1316 = vadd.f32 %v1078, %v1315
    %v1317 = vpop.f32.mrb[0].mxu0
    %1318 = vmatprep.mubr.f32.mxu0 0.0
    %1319 = vmatmul.mubr.f32.gmra.mrb[0].mxu0 %v1247
    %v1320 = vpop.f32.mrb[0].mxu0
    %v1321 = vadd.f32 %v1078, %v1320
    %v1322 = vpop.f32.mrb[0].mxu0
    %1323 = vdwg.mxu0
    %v1324 = vmax.f32 %v1316, 0.0
    %v1325 = vmax.f32 %v1321, 0.0
    %v1326 = vmul.f32 %v1324, %v1241
    %v1327 = vmul.f32 %v1325, %v1242
    %v1328 = vsub.f32 1.0, %v1241
    %v1329 = vsub.f32 1.0, %v1242
    %v1330 = vmul.f32 %v1169, %v1328
    %v1331 = vmul.f32 %v1170, %v1329
    %v1332 = vadd.f32 %v1326, %v1330
    %v1333 = vadd.f32 %v1327, %v1331
    %v1334 = vadd.f32 %v1324, %v913
    %v1335 = vadd.f32 %v1325, %v914
    %v1336 = vlaneseq
    %v1337 = vshrl.u32 %v1336, 7
    %v1338 = vsub.s32 2, %v1337
    %v1339 = vrot.slane %v915, %v1338
    %v1340 = vadd.f32 %v1334, %v1339
    %v1341 = vadd.f32 %v1335, %v1339
    %v1342 = vmul.f32 %v1340, %v1013
    %v1343 = vmul.f32 %v1341, %v1013
    %v1344 = vsel %vm283, %v1342, 0.0
    %1345 = vadd.xlane.f32.xlu0 %v1344
    %v1346 = vpop.xlane.xlu0 %1345
    %v1347 = vsel %vm283, %v1343, 0.0
    %1348 = vadd.xlane.f32.xlu0 %v1347
    %v1349 = vpop.xlane.xlu0 %1348
    %v1350 = vadd.f32 %v1346, %v1023
    %v1351 = vadd.f32 %v1349, %v1023
    %v1352 = vxor.u32 %v1350, 2147483648
    %v1353 = vxor.u32 %v1351, 2147483648
    %v1354 = vmul.f32 %v1352, 1.442695
    %v1355 = vpow.pop %v1354
    %v1356 = vmul.f32 %v1353, 1.442695
    %v1357 = vpow.pop %v1356
    %v1358 = vadd.f32 %v1355, 1.0
    %v1359 = vadd.f32 %v1357, 1.0
    %v1360 = vrcp.pop %v1358
    %v1361 = vmul.f32 1.0, %v1360
    %v1362 = vrcp.pop %v1359
    %v1363 = vmul.f32 1.0, %v1362
    %vm1364 = vcmp.lt.f32.partialorder %v1239, 1.0
    %vm1365 = vcmp.lt.f32.partialorder %v1240, 1.0
    %v1366 = vsel %vm1364, 1, 0
    %v1367 = vsel %vm1365, 1, 0
    %v1368 = vcvt.s32.f32 %v1366
    %v1369 = vcvt.s32.f32 %v1367
    %v1370 = vmul.f32 %v1361, %v1368
    %v1371 = vmul.f32 %v1363, %v1369
    %v1372 = vadd.f32 %v1239, %v1370
    %v1373 = vadd.f32 %v1240, %v1371
    %vm1374 = vcmp.gt.f32.partialorder %v1372, 0.9
    %vm1375 = vcmp.gt.f32.partialorder %v1373, 0.9
    %v1376 = vsel %vm1374, 1, 0
    %v1377 = vsel %vm1375, 1, 0
    %v1378 = vcvt.s32.f32 %v1376
    %v1379 = vcvt.s32.f32 %v1377
    %v1380 = vmul.f32 %v1378, %v1368
    %v1381 = vmul.f32 %v1379, %v1369
    %vm1382 = vcmp.le.f32.partialorder %v1372, 0.9
    %vm1383 = vcmp.le.f32.partialorder %v1373, 0.9
    %v1384 = vsel %vm1382, 1, 0
    %v1385 = vsel %vm1383, 1, 0
    %v1386 = vcvt.s32.f32 %v1384
    %v1387 = vcvt.s32.f32 %v1385
    %v1388 = vmul.f32 %v1386, %v1368
    %v1389 = vmul.f32 %v1387, %v1369
    %v1390 = vmul.f32 %v1361, %v1388
    %v1391 = vmul.f32 %v1363, %v1389
    %v1392 = vadd.f32 %v1239, %v1390
    %v1393 = vadd.f32 %v1240, %v1391
    %v1394 = vsub.f32 1.0, %v1392
    %v1395 = vsub.f32 1.0, %v1393
    %v1396 = vmul.f32 %v1380, %v1394
    %v1397 = vmul.f32 %v1381, %v1395
    %v1398 = vadd.f32 %v1235, %v1396
    %v1399 = vadd.f32 %v1236, %v1397
    %v1400 = vmul.f32 %v1380, %v1398
    %v1401 = vmul.f32 %v1381, %v1399
    %v1402 = vadd.f32 %v1390, %v1400
    %v1403 = vadd.f32 %v1391, %v1401
    %v1405 = vsel %vm283, %v1340, 0
    %v1408 = vsel %vm283, %v1341, 0
    %1410 = vmatprep.subr.mxu0 0.0
    %1411 = vmatpush1.msra.mxu0 %v917
    %1412 = vmatprep.subr.mxu0 0.0
    %1413 = vmatpush1.msra.mxu0 %v918
    %1414 = vmatprep.subr.mxu0 0.0
    %1415 = vmatpush1.msra.mxu0 %v919
    %1416 = vmatprep.subr.mxu0 0.0
    %1417 = vmatpush1.msra.mxu0 %v920
    %1418 = vmatprep.subr.mxu0 0.0
    %1419 = vmatpush1.msra.mxu0 0.0
    %1420 = vmatprep.subr.mxu0 0.0
    %1421 = vmatpush1.msra.mxu0 0.0
    %1422 = vmatprep.subr.mxu0 0.0
    %1423 = vmatpush1.msra.mxu0 0.0
    %1424 = vmatprep.subr.mxu0 0.0
    %1425 = vmatpush1.msra.mxu0 0.0
    %1426 = vmatprep.subr.mxu0 0.0
    %1427 = vmatpush1.msra.mxu0 0.0
    %1428 = vmatprep.subr.mxu0 0.0
    %1429 = vmatpush1.msra.mxu0 0.0
    %1430 = vmatprep.subr.mxu0 0.0
    %1431 = vmatpush1.msra.mxu0 0.0
    %1432 = vmatprep.subr.mxu0 0.0
    %1433 = vmatpush1.msra.mxu0 0.0
    %1434 = vmatprep.subr.mxu0 0.0
    %1435 = vmatpush1.msra.mxu0 0.0
    %1436 = vmatprep.subr.mxu0 0.0
    %1437 = vmatpush1.msra.mxu0 0.0
    %1438 = vmatprep.subr.mxu0 0.0
    %1439 = vmatpush1.msra.mxu0 0.0
    %1440 = vmatprep.subr.mxu0 0.0
    %1441 = vmatpush1.msra.mxu0 0.0
    %1442 = vmatprep.subr.mxu0 0.0
    %1443 = vmatpush1.msra.mxu0 0.0
    %1444 = vmatprep.subr.mxu0 0.0
    %1445 = vmatpush1.msra.mxu0 0.0
    %1446 = vmatprep.subr.mxu0 0.0
    %1447 = vmatpush1.msra.mxu0 0.0
    %1448 = vmatprep.subr.mxu0 0.0
    %1449 = vmatpush1.msra.mxu0 0.0
    %1450 = vmatprep.subr.mxu0 0.0
    %1451 = vmatpush1.msra.mxu0 0.0
    %1452 = vmatprep.subr.mxu0 0.0
    %1453 = vmatpush1.msra.mxu0 0.0
    %1454 = vmatprep.subr.mxu0 0.0
    %1455 = vmatpush1.msra.mxu0 0.0
    %1456 = vmatprep.subr.mxu0 0.0
    %1457 = vmatpush1.msra.mxu0 0.0
    %1458 = vmatprep.subr.mxu0 0.0
    %1459 = vmatpush1.msra.mxu0 0.0
    %1460 = vmatprep.subr.mxu0 0.0
    %1461 = vmatpush1.msra.mxu0 0.0
    %1462 = vmatprep.subr.mxu0 0.0
    %1463 = vmatpush1.msra.mxu0 0.0
    %1464 = vmatprep.subr.mxu0 0.0
    %1465 = vmatpush1.msra.mxu0 0.0
    %1466 = vmatprep.subr.mxu0 0.0
    %1467 = vmatpush1.msra.mxu0 0.0
    %1468 = vmatprep.subr.mxu0 0.0
    %1469 = vmatpush1.msra.mxu0 0.0
    %1470 = vmatprep.subr.mxu0 0.0
    %1471 = vmatpush1.msra.mxu0 0.0
    %1472 = vmatprep.subr.mxu0 0.0
    %1473 = vmatpush1.msra.mxu0 0.0
    %1474 = vmatprep.mubr.f32.mxu0 0.0
    %1475 = vmatmul.mubr.f32.gmra.mrb[0].mxu0 %v1405
    %v1476 = vpop.f32.mrb[0].mxu0
    %v1477 = vadd.f32 %v1078, %v1476
    %v1478 = vpop.f32.mrb[0].mxu0
    %1479 = vmatprep.mubr.f32.mxu0 0.0
    %1480 = vmatmul.mubr.f32.gmra.mrb[0].mxu0 %v1408
    %v1481 = vpop.f32.mrb[0].mxu0
    %v1482 = vadd.f32 %v1078, %v1481
    %v1483 = vpop.f32.mrb[0].mxu0
    %1484 = vdwg.mxu0
    %v1485 = vmax.f32 %v1477, 0.0
    %v1486 = vmax.f32 %v1482, 0.0
    %v1487 = vmul.f32 %v1485, %v1402
    %v1488 = vmul.f32 %v1486, %v1403
    %v1489 = vsub.f32 1.0, %v1402
    %v1490 = vsub.f32 1.0, %v1403
    %v1491 = vmul.f32 %v1332, %v1489
    %v1492 = vmul.f32 %v1333, %v1490
    %v1493 = vadd.f32 %v1487, %v1491
    %v1494 = vadd.f32 %v1488, %v1492
    %v1495 = vsel %vm283, %v1493, 0.0
    %1496 = vadd.xlane.f32.xlu0 %v1495
    %v1497 = vpop.xlane.xlu0 %1496
    %v1498 = vsel %vm283, %v1494, 0.0
    %1499 = vadd.xlane.f32.xlu0 %v1498
    %v1500 = vpop.xlane.xlu0 %1499
    %v1501 = vmul.f32 %v1497, %v866
    %v1502 = vmul.f32 %v1500, %v866
    %v1503 = vsub.f32 %v1493, %v1501
    %v1504 = vsub.f32 %v1494, %v1502
    %v1505 = vmul.f32 %v1503, %v1503
    %v1506 = vmul.f32 %v1504, %v1504
    %v1507 = vsel %vm283, %v1505, 0.0
    %1508 = vadd.xlane.f32.xlu0 %v1507
    %v1509 = vpop.xlane.xlu0 %1508
    %v1510 = vsel %vm283, %v1506, 0.0
    %1511 = vadd.xlane.f32.xlu0 %v1510
    %v1512 = vpop.xlane.xlu0 %1511
    %v1513 = vmul.f32 %v1509, %v866
    %v1514 = vmul.f32 %v1512, %v866
    %v1515 = vadd.f32 %v1513, 1e-06
    %v1516 = vadd.f32 %v1514, 1e-06
    %v1517 = vrsqrt.pop %v1515
    %v1518 = vrsqrt.pop %v1516
    %v1519 = vmul.f32 %v1503, %v1517
    %v1520 = vmul.f32 %v1504, %v1518
    %v1521 = vld [vmem:[%s17] sm:$0x1]
    %v1523 = vlaneseq
    %v1524 = vshrl.u32 %v1523, 7
    %v1525 = vsub.s32 0, %v1524
    %v1526 = vrot.slane %v1521, %v1525
    %v1528 = vmul.f32 %v1519, %v1526
    %v1529 = vmul.f32 %v1520, %v1526
    %v1530 = vld [vmem:[%s18] sm:$0x1]
    %v1532 = vlaneseq
    %v1533 = vshrl.u32 %v1532, 7
    %v1534 = vsub.s32 0, %v1533
    %v1535 = vrot.slane %v1530, %v1534
    %v1537 = vadd.f32 %v1528, %v1535
    %v1538 = vadd.f32 %v1529, %v1535
    %v1539 = vld [vmem:[%s19] sm:$0x3]
    %vm1540 = vcmask 130048
    %v1542 = vsel %vm1540, %v1539, 0
    %1544 = vmatprep.subr.mxu0 0.0
    %1545 = vmatpush1.msra.mxu0 %v1537
    %1546 = vmatprep.subr.mxu0 0.0
    %1547 = vmatpush1.msra.mxu0 %v1538
    %1548 = vmatprep.subr.mxu0 0.0
    %1549 = vmatpush1.msra.mxu0 0.0
    %1550 = vmatprep.subr.mxu0 0.0
    %1551 = vmatpush1.msra.mxu0 0.0
    %1552 = vmatprep.subr.mxu0 0.0
    %1553 = vmatpush1.msra.mxu0 0.0
    %1554 = vmatprep.subr.mxu0 0.0
    %1555 = vmatpush1.msra.mxu0 0.0
    %1556 = vmatprep.subr.mxu0 0.0
    %1557 = vmatpush1.msra.mxu0 0.0
    %1558 = vmatprep.subr.mxu0 0.0
    %1559 = vmatpush1.msra.mxu0 0.0
    %1560 = vmatprep.subr.mxu0 0.0
    %1561 = vmatpush1.msra.mxu0 0.0
    %1562 = vmatprep.subr.mxu0 0.0
    %1563 = vmatpush1.msra.mxu0 0.0
    %1564 = vmatprep.subr.mxu0 0.0
    %1565 = vmatpush1.msra.mxu0 0.0
    %1566 = vmatprep.subr.mxu0 0.0
    %1567 = vmatpush1.msra.mxu0 0.0
    %1568 = vmatprep.subr.mxu0 0.0
    %1569 = vmatpush1.msra.mxu0 0.0
    %1570 = vmatprep.subr.mxu0 0.0
    %1571 = vmatpush1.msra.mxu0 0.0
    %1572 = vmatprep.subr.mxu0 0.0
    %1573 = vmatpush1.msra.mxu0 0.0
    %1574 = vmatprep.subr.mxu0 0.0
    %1575 = vmatpush1.msra.mxu0 0.0
    %1576 = vmatprep.subr.mxu0 0.0
    %1577 = vmatpush1.msra.mxu0 0.0
    %1578 = vmatprep.subr.mxu0 0.0
    %1579 = vmatpush1.msra.mxu0 0.0
    %1580 = vmatprep.subr.mxu0 0.0
    %1581 = vmatpush1.msra.mxu0 0.0
    %1582 = vmatprep.subr.mxu0 0.0
    %1583 = vmatpush1.msra.mxu0 0.0
    %1584 = vmatprep.subr.mxu0 0.0
    %1585 = vmatpush1.msra.mxu0 0.0
    %1586 = vmatprep.subr.mxu0 0.0
    %1587 = vmatpush1.msra.mxu0 0.0
    %1588 = vmatprep.subr.mxu0 0.0
    %1589 = vmatpush1.msra.mxu0 0.0
    %1590 = vmatprep.subr.mxu0 0.0
    %1591 = vmatpush1.msra.mxu0 0.0
    %1592 = vmatprep.subr.mxu0 0.0
    %1593 = vmatpush1.msra.mxu0 0.0
    %1594 = vmatprep.subr.mxu0 0.0
    %1595 = vmatpush1.msra.mxu0 0.0
    %1596 = vmatprep.subr.mxu0 0.0
    %1597 = vmatpush1.msra.mxu0 0.0
    %1598 = vmatprep.subr.mxu0 0.0
    %1599 = vmatpush1.msra.mxu0 0.0
    %1600 = vmatprep.subr.mxu0 0.0
    %1601 = vmatpush1.msra.mxu0 0.0
    %1602 = vmatprep.subr.mxu0 0.0
    %1603 = vmatpush1.msra.mxu0 0.0
    %1604 = vmatprep.subr.mxu0 0.0
    %1605 = vmatpush1.msra.mxu0 0.0
    %1606 = vmatprep.subr.mxu0 0.0
    %1607 = vmatpush1.msra.mxu0 0.0
    %1608 = vmatprep.mubr.f32.mxu0 0.0
    %1609 = vmatmul.mubr.f32.gmra.mrb[0].mxu0 %v1542
    %v1610 = vpop.f32.mrb[0].mxu0
    %v1611 = vadd.f32 0.0, %v1610
    %v1612 = vpop.f32.mrb[0].mxu0
    %1613 = vdwg.mxu0
    %v1615 = vsel %vm1540, %v905, 0
    %1617 = vmatprep.subr.mxu0 0.0
    %1618 = vmatpush1.msra.mxu0 %v903
    %1619 = vmatprep.subr.mxu0 0.0
    %1620 = vmatpush1.msra.mxu0 %v904
    %1621 = vmatprep.subr.mxu0 0.0
    %1622 = vmatpush1.msra.mxu0 0.0
    %1623 = vmatprep.subr.mxu0 0.0
    %1624 = vmatpush1.msra.mxu0 0.0
    %1625 = vmatprep.subr.mxu0 0.0
    %1626 = vmatpush1.msra.mxu0 0.0
    %1627 = vmatprep.subr.mxu0 0.0
    %1628 = vmatpush1.msra.mxu0 0.0
    %1629 = vmatprep.subr.mxu0 0.0
    %1630 = vmatpush1.msra.mxu0 0.0
    %1631 = vmatprep.subr.mxu0 0.0
    %1632 = vmatpush1.msra.mxu0 0.0
    %1633 = vmatprep.subr.mxu0 0.0
    %1634 = vmatpush1.msra.mxu0 0.0
    %1635 = vmatprep.subr.mxu0 0.0
    %1636 = vmatpush1.msra.mxu0 0.0
    %1637 = vmatprep.subr.mxu0 0.0
    %1638 = vmatpush1.msra.mxu0 0.0
    %1639 = vmatprep.subr.mxu0 0.0
    %1640 = vmatpush1.msra.mxu0 0.0
    %1641 = vmatprep.subr.mxu0 0.0
    %1642 = vmatpush1.msra.mxu0 0.0
    %1643 = vmatprep.subr.mxu0 0.0
    %1644 = vmatpush1.msra.mxu0 0.0
    %1645 = vmatprep.subr.mxu0 0.0
    %1646 = vmatpush1.msra.mxu0 0.0
    %1647 = vmatprep.subr.mxu0 0.0
    %1648 = vmatpush1.msra.mxu0 0.0
    %1649 = vmatprep.subr.mxu0 0.0
    %1650 = vmatpush1.msra.mxu0 0.0
    %1651 = vmatprep.subr.mxu0 0.0
    %1652 = vmatpush1.msra.mxu0 0.0
    %1653 = vmatprep.subr.mxu0 0.0
    %1654 = vmatpush1.msra.mxu0 0.0
    %1655 = vmatprep.subr.mxu0 0.0
    %1656 = vmatpush1.msra.mxu0 0.0
    %1657 = vmatprep.subr.mxu0 0.0
    %1658 = vmatpush1.msra.mxu0 0.0
    %1659 = vmatprep.subr.mxu0 0.0
    %1660 = vmatpush1.msra.mxu0 0.0
    %1661 = vmatprep.subr.mxu0 0.0
    %1662 = vmatpush1.msra.mxu0 0.0
    %1663 = vmatprep.subr.mxu0 0.0
    %1664 = vmatpush1.msra.mxu0 0.0
    %1665 = vmatprep.subr.mxu0 0.0
    %1666 = vmatpush1.msra.mxu0 0.0
    %1667 = vmatprep.subr.mxu0 0.0
    %1668 = vmatpush1.msra.mxu0 0.0
    %1669 = vmatprep.subr.mxu0 0.0
    %1670 = vmatpush1.msra.mxu0 0.0
    %1671 = vmatprep.subr.mxu0 0.0
    %1672 = vmatpush1.msra.mxu0 0.0
    %1673 = vmatprep.subr.mxu0 0.0
    %1674 = vmatpush1.msra.mxu0 0.0
    %1675 = vmatprep.subr.mxu0 0.0
    %1676 = vmatpush1.msra.mxu0 0.0
    %1677 = vmatprep.subr.mxu0 0.0
    %1678 = vmatpush1.msra.mxu0 0.0
    %1679 = vmatprep.subr.mxu0 0.0
    %1680 = vmatpush1.msra.mxu0 0.0
    %1681 = vmatprep.mubr.f32.mxu0 0.0
    %1682 = vmatmul.mubr.f32.gmra.mrb[0].mxu0 %v1615
    %v1683 = vpop.f32.mrb[0].mxu0
    %v1684 = vadd.f32 %v1611, %v1683
    %v1685 = vpop.f32.mrb[0].mxu0
    %1686 = vdwg.mxu0
    %v1687 = vld [vmem:[#allocation27] sm:$0xff]
    %v1688 = vld [vmem:[#allocation27 + $0x8] sm:$0xff]
    %v1689 = vld [vmem:[#allocation27 + $0x10] sm:$0xff]
    %v1690 = vld [vmem:[#allocation27 + $0x18] sm:$0xff]
    %v1691 = vld [vmem:[%s21] sm:$0x1]
    %v1693 = vlaneseq
    %v1694 = vshrl.u32 %v1693, 7
    %v1695 = vsub.s32 0, %v1694
    %v1696 = vrot.slane %v1691, %v1695
    %v1699 = vsel %vm283, %v1684, 0
    %1701 = vmatprep.subr.mxu0 0.0
    %1702 = vmatpush1.msra.mxu0 %v1687
    %1703 = vmatprep.subr.mxu0 0.0
    %1704 = vmatpush1.msra.mxu0 %v1688
    %1705 = vmatprep.subr.mxu0 0.0
    %1706 = vmatpush1.msra.mxu0 %v1689
    %1707 = vmatprep.subr.mxu0 0.0
    %1708 = vmatpush1.msra.mxu0 %v1690
    %1709 = vmatprep.subr.mxu0 0.0
    %1710 = vmatpush1.msra.mxu0 0.0
    %1711 = vmatprep.subr.mxu0 0.0
    %1712 = vmatpush1.msra.mxu0 0.0
    %1713 = vmatprep.subr.mxu0 0.0
    %1714 = vmatpush1.msra.mxu0 0.0
    %1715 = vmatprep.subr.mxu0 0.0
    %1716 = vmatpush1.msra.mxu0 0.0
    %1717 = vmatprep.subr.mxu0 0.0
    %1718 = vmatpush1.msra.mxu0 0.0
    %1719 = vmatprep.subr.mxu0 0.0
    %1720 = vmatpush1.msra.mxu0 0.0
    %1721 = vmatprep.subr.mxu0 0.0
    %1722 = vmatpush1.msra.mxu0 0.0
    %1723 = vmatprep.subr.mxu0 0.0
    %1724 = vmatpush1.msra.mxu0 0.0
    %1725 = vmatprep.subr.mxu0 0.0
    %1726 = vmatpush1.msra.mxu0 0.0
    %1727 = vmatprep.subr.mxu0 0.0
    %1728 = vmatpush1.msra.mxu0 0.0
    %1729 = vmatprep.subr.mxu0 0.0
    %1730 = vmatpush1.msra.mxu0 0.0
    %1731 = vmatprep.subr.mxu0 0.0
    %1732 = vmatpush1.msra.mxu0 0.0
    %1733 = vmatprep.subr.mxu0 0.0
    %1734 = vmatpush1.msra.mxu0 0.0
    %1735 = vmatprep.subr.mxu0 0.0
    %1736 = vmatpush1.msra.mxu0 0.0
    %1737 = vmatprep.subr.mxu0 0.0
    %1738 = vmatpush1.msra.mxu0 0.0
    %1739 = vmatprep.subr.mxu0 0.0
    %1740 = vmatpush1.msra.mxu0 0.0
    %1741 = vmatprep.subr.mxu0 0.0
    %1742 = vmatpush1.msra.mxu0 0.0
    %1743 = vmatprep.subr.mxu0 0.0
    %1744 = vmatpush1.msra.mxu0 0.0
    %1745 = vmatprep.subr.mxu0 0.0
    %1746 = vmatpush1.msra.mxu0 0.0
    %1747 = vmatprep.subr.mxu0 0.0
    %1748 = vmatpush1.msra.mxu0 0.0
    %1749 = vmatprep.subr.mxu0 0.0
    %1750 = vmatpush1.msra.mxu0 0.0
    %1751 = vmatprep.subr.mxu0 0.0
    %1752 = vmatpush1.msra.mxu0 0.0
    %1753 = vmatprep.subr.mxu0 0.0
    %1754 = vmatpush1.msra.mxu0 0.0
    %1755 = vmatprep.subr.mxu0 0.0
    %1756 = vmatpush1.msra.mxu0 0.0
    %1757 = vmatprep.subr.mxu0 0.0
    %1758 = vmatpush1.msra.mxu0 0.0
    %1759 = vmatprep.subr.mxu0 0.0
    %1760 = vmatpush1.msra.mxu0 0.0
    %1761 = vmatprep.subr.mxu0 0.0
    %1762 = vmatpush1.msra.mxu0 0.0
    %1763 = vmatprep.subr.mxu0 0.0
    %1764 = vmatpush1.msra.mxu0 0.0
    %1765 = vmatprep.mubr.f32.mxu0 0.0
    %1766 = vmatmul.mubr.f32.gmra.mrb[0].mxu0 %v1699
    %v1767 = vpop.f32.mrb[0].mxu0
    %v1768 = vadd.f32 %v1696, %v1767
    %v1769 = vpop.f32.mrb[0].mxu0
    %1770 = vdwg.mxu0
    %v1771 = vxor.u32 %v1768, 2147483648
    %v1772 = vmul.f32 %v1771, 1.442695
    %v1773 = vpow.pop %v1772
    %v1774 = vadd.f32 %v1773, 1.0
    %v1775 = vrcp.pop %v1774
    %v1776 = vmul.f32 1.0, %v1775
    %v1777 = vlaneseq
    %v1778 = vand.u32 %v1777, 127
    %vm1779 = vcmp.lt.s32.totalorder %v1778, 2
    %v1780 = vsel %vm1779, %v1776, -1e+30
    %vm1781 = vcmask 1041408
    %v1782 = vsel %vm1781, %v1780, -inf
    %1783 = vmax.xlane.f32.xlu0 %v1782
    %v1784 = vpop.xlane.xlu0 %1783
    %v1785 = vsub.f32 %v1780, %v1784
    %v1786 = vmul.f32 %v1785, 1.442695
    %v1787 = vpow.pop %v1786
    %v1788 = vsel %vm1781, %v1787, 0.0
    %1789 = vadd.xlane.f32.xlu0 %v1788
    %v1790 = vpop.xlane.xlu0 %1789
    %v1791 = vrcp.pop %v1790
    %v1792 = vmul.f32 %v1787, %v1791
    %1793 = vst [vmem:[#allocation28] sm:$0x3] %v1792
    // Predicated region
    $region158: #{tpu_custom_call.1} parent=1 // pred_check
      _
    $region159: #{tpu_custom_call.1} parent=1 // pred_check_branch
      %1795 = sbr.rel (0) target = $region161
    $region160: #{tpu_custom_call.1} parent=1 // pred_region
      %s1797 = ssub.s32 32, 32
      %1798 = vsyncadd [#allocation6], %s1797
      %s1800 = sshll.u32 [#allocation28], 4
      %s1801 = int_to_ptr.vmem [resolvable:$true] %s1800
      %1803 = dma.vmem_to_hbm [thread:$0]  %s1801, 32, %s24, [#allocation6]
    $region161: #{tpu_custom_call.1} parent=1 // pred_fallthru
      _
    // Predicated region
    $region162: #{tpu_custom_call.1} parent=1 // pred_check
      _
    $region163: #{tpu_custom_call.1} parent=1 // pred_check_branch
      %1805 = sbr.rel (0) target = $region165
    $region164: #{tpu_custom_call.1} parent=1 // pred_region
      %1806 = dma.done [#allocation6], 32
    $region165: #{tpu_custom_call.1} parent=1 // pred_fallthru
      _
    %1807 = vsyncpa [#allocation5], 1
    %1808 = vsyncpa [#allocation8], 1
    %1809 = vsyncpa [#allocation11], 1
    %1810 = vsyncpa [#allocation14], 1
    %1811 = vsyncpa [#allocation17], 1
    %1812 = vsyncpa [#allocation20], 1
    %1813 = vsyncpa [#allocation23], 1
    %1814 = vsyncpa [#allocation26], 1
    %1815 = vsyncpa [#allocation6], 1

</llo_original>
